<compile_context>
chip_gen: v5e
topology: v5e:2x2
jax: 0.10.0
libtpu: 0.0.40
codegen_flags: <defaults>
</compile_context>

<pallas_src>
import functools

import jax
import jax.numpy as jnp
from jax.experimental import pallas as pl
from jax.experimental.pallas import tpu as pltpu


# ----------------------------------------------------------------------------
# small helpers
# ----------------------------------------------------------------------------
def _round_up(x, m):
    return ((x + m - 1) // m) * m


def _cdiv(a, b):
    return (a + b - 1) // b


def _pick_tile(l_out, mult, max_tile):
    cap = max(mult, (max_tile // mult) * mult)
    return int(min(_round_up(max(int(l_out), 1), mult), cap))


def _zero_pad_rows(x, pad_left, total_rows):
    b, l, c = x.shape
    return jnp.pad(x, ((0, 0), (pad_left, total_rows - l - pad_left), (0, 0)))


def _iota_rows(n, start):
    return jax.lax.broadcasted_iota(jnp.int32, (n, 1), 0) + start


def _compiler_params():
    # Both grid axes write disjoint output blocks -> safe to shard across cores.
    return pltpu.CompilerParams(dimension_semantics=("parallel", "parallel"))


# ----------------------------------------------------------------------------
# Stage 1 kernel:  x -> x2 = relu(conv2(relu(conv1(x)+b1))+b2) + relu(conv1(x)+b1)
# ----------------------------------------------------------------------------
def _stage1_kernel(xm_ref, xh_ref, w1_ref, w2_ref, b_ref, o_ref, *, tile, length, cdt):
    # Window = zero-padded x rows [j*tile, j*tile + tile + sub); padded row p == x row p-2.
    j = pl.program_id(1)
    base = j * tile
    xw = jnp.concatenate([xm_ref[0], xh_ref[0]], axis=0)            # (tile+sub, C_in)

    # x1 = relu(conv1 + b1) on rows [base-1, base+tile]  (tile+2 rows, incl. conv2 halo)
    n1 = tile + 2
    acc1 = jnp.dot(xw[0:n1], w1_ref[0], preferred_element_type=jnp.float32)
    acc1 = acc1 + jnp.dot(xw[1:1 + n1], w1_ref[1], preferred_element_type=jnp.float32)
    acc1 = acc1 + jnp.dot(xw[2:2 + n1], w1_ref[2], preferred_element_type=jnp.float32)
    x1 = jnp.maximum(acc1 + b_ref[0], 0.0)
    # conv2 must see zeros outside [0, L): mask halo rows (bias makes them nonzero).
    rows1 = _iota_rows(n1, base - 1)
    x1 = jnp.where((rows1 >= 0) & (rows1 < length), x1, 0.0)
    x1c = x1.astype(cdt)

    # x2 = relu(conv2 + b2) + x1 on rows [base, base+tile)
    acc2 = jnp.dot(x1c[0:tile], w2_ref[0], preferred_element_type=jnp.float32)
    acc2 = acc2 + jnp.dot(x1c[1:1 + tile], w2_ref[1], preferred_element_type=jnp.float32)
    acc2 = acc2 + jnp.dot(x1c[2:2 + tile], w2_ref[2], preferred_element_type=jnp.float32)
    x2 = jnp.maximum(acc2 + b_ref[1], 0.0) + x1[1:1 + tile]
    o_ref[0] = x2.astype(o_ref.dtype)


def _stage1(x, w1, b1, w2, b2, *, tile, sub, cdt):
    B, L, c_in = x.shape
    c = w1.shape[0]
    nt = _cdiv(L, tile)
    lp = nt * tile + sub                                   # padded length (left pad 2 included)
    xp = _zero_pad_rows(x.astype(cdt), 2, lp)
    w1m = jnp.transpose(w1, (2, 1, 0)).astype(cdt)         # (3, c_in, c): per-tap matrices
    w2m = jnp.transpose(w2, (2, 1, 0)).astype(cdt)         # (3, c,    c)
    bb = jnp.stack([b1, b2]).reshape(2, 1, c).astype(jnp.float32)

    out = pl.pallas_call(
        functools.partial(_stage1_kernel, tile=tile, length=L, cdt=cdt),
        out_shape=jax.ShapeDtypeStruct((B, nt * tile, c), cdt),
        grid=(B, nt),
        in_specs=[
            pl.BlockSpec((1, tile, c_in), lambda b, j: (b, j, 0)),                         # main tile
            pl.BlockSpec((1, sub, c_in), lambda b, j: (b, (j + 1) * (tile // sub), 0)),    # right halo
            pl.BlockSpec((3, c_in, c), lambda b, j: (0, 0, 0)),
            pl.BlockSpec((3, c, c), lambda b, j: (0, 0, 0)),
            pl.BlockSpec((2, 1, c), lambda b, j: (0, 0, 0)),                               # biases (tiny)
        ],
        out_specs=pl.BlockSpec((1, tile, c), lambda b, j: (b, j, 0)),
        compiler_params=_compiler_params(),
    )(xp, xp, w1m, w2m, bb)
    return out[:, :L, :]


# ----------------------------------------------------------------------------
# Stage 2 kernel: x2 -> x5   (strided conv3, then conv4/conv5 with residuals)
# x2 is presented as "super-rows" of 2*C channels so the stride-2 conv becomes
# two shifted matmuls against (2C, C) weight slabs.
# ----------------------------------------------------------------------------
def _stage2_kernel(ym_ref, yh_ref, w3_ref, w4_ref, w5_ref, b_ref, o_ref, *, tile, length, cdt):
    j = pl.program_id(1)
    base = j * tile
    y = jnp.concatenate([ym_ref[0], yh_ref[0]], axis=0)             # (tile+sub, 2*C)

    # x3 = relu(conv3 + b3)   (K=4, S=2, P=2) on rows [base-2, base+tile+2)
    n3 = tile + 4
    acc3 = jnp.dot(y[0:n3], w3_ref[0], preferred_element_type=jnp.float32)
    acc3 = acc3 + jnp.dot(y[1:1 + n3], w3_ref[1], preferred_element_type=jnp.float32)
    x3 = jnp.maximum(acc3 + b_ref[0], 0.0)
    rows3 = _iota_rows(n3, base - 2)
    x3 = jnp.where((rows3 >= 0) & (rows3 < length), x3, 0.0)        # conv4 zero padding
    x3c = x3.astype(cdt)

    # x4 = relu(conv4 + b4) + x3 on rows [base-1, base+tile+1)
    n4 = tile + 2
    acc4 = jnp.dot(x3c[0:n4], w4_ref[0], preferred_element_type=jnp.float32)
    acc4 = acc4 + jnp.dot(x3c[1:1 + n4], w4_ref[1], preferred_element_type=jnp.float32)
    acc4 = acc4 + jnp.dot(x3c[2:2 + n4], w4_ref[2], preferred_element_type=jnp.float32)
    x4 = jnp.maximum(acc4 + b_ref[1], 0.0) + x3[1:1 + n4]
    rows4 = _iota_rows(n4, base - 1)
    x4 = jnp.where((rows4 >= 0) & (rows4 < length), x4, 0.0)        # conv5 zero padding
    x4c = x4.astype(cdt)

    # x5 = relu(conv5 + b5) + x4 on rows [base, base+tile)
    acc5 = jnp.dot(x4c[0:tile], w5_ref[0], preferred_element_type=jnp.float32)
    acc5 = acc5 + jnp.dot(x4c[1:1 + tile], w5_ref[1], preferred_element_type=jnp.float32)
    acc5 = acc5 + jnp.dot(x4c[2:2 + tile], w5_ref[2], preferred_element_type=jnp.float32)
    x5 = jnp.maximum(acc5 + b_ref[2], 0.0) + x4[1:1 + tile]
    o_ref[0] = x5.astype(o_ref.dtype)


def _stage2(x2, w3, b3, w4, b4, w5, b5, *, tile, sub, cdt):
    B, L, c = x2.shape
    l3 = L // 2 + 1                                        # (L + 2*2 - 4)//2 + 1
    nt = _cdiv(l3, tile)
    s_rows = nt * tile + sub                               # super-rows (pairs of x2 rows)
    xp = _zero_pad_rows(x2.astype(cdt), 6, 2 * s_rows)     # left context of conv3->4->5 = 6
    yp = xp.reshape(B, s_rows, 2 * c)                      # free contiguous reshape
    wt3 = jnp.transpose(w3, (2, 1, 0))                     # (4, c, c)
    w3m = jnp.stack([wt3[0:2].reshape(2 * c, c),
                     wt3[2:4].reshape(2 * c, c)]).astype(cdt)   # taps (0,1) and (2,3)
    w4m = jnp.transpose(w4, (2, 1, 0)).astype(cdt)
    w5m = jnp.transpose(w5, (2, 1, 0)).astype(cdt)
    bb = jnp.stack([b3, b4, b5]).reshape(3, 1, c).astype(jnp.float32)

    out = pl.pallas_call(
        functools.partial(_stage2_kernel, tile=tile, length=l3, cdt=cdt),
        out_shape=jax.ShapeDtypeStruct((B, nt * tile, c), cdt),
        grid=(B, nt),
        in_specs=[
            pl.BlockSpec((1, tile, 2 * c), lambda b, j: (b, j, 0)),
            pl.BlockSpec((1, sub, 2 * c), lambda b, j: (b, (j + 1) * (tile // sub), 0)),
            pl.BlockSpec((2, 2 * c, c), lambda b, j: (0, 0, 0)),
            pl.BlockSpec((3, c, c), lambda b, j: (0, 0, 0)),
            pl.BlockSpec((3, c, c), lambda b, j: (0, 0, 0)),
            pl.BlockSpec((3, 1, c), lambda b, j: (0, 0, 0)),
        ],
        out_specs=pl.BlockSpec((1, tile, c), lambda b, j: (b, j, 0)),
        compiler_params=_compiler_params(),
    )(yp, yp, w3m, w4m, w5m, bb)
    return out[:, :l3, :]


# ----------------------------------------------------------------------------
# Stage 3 kernel: whole residual stack (unrolled) + final relu + x5, in one call.
# h stays resident in VMEM/vregs across all layers; the window shrinks by 1 row
# per side per layer.
# ----------------------------------------------------------------------------
def _stage3_kernel(xm_ref, xh_ref, wa_ref, wb_ref, o_ref, *, tile, length, n_layers, cdt):
    j = pl.program_id(1)
    base = j * tile
    hw = jnp.concatenate([xm_ref[0], xh_ref[0]], axis=0).astype(jnp.float32)
    h = hw[0:tile + 2 * n_layers]                                    # h_0 = x5 window
    for i in range(n_layers):
        w_i = tile + 2 * (n_layers - i)
        rows = _iota_rows(w_i, base - (n_layers - i))
        # conv_a is bias-free and the reference zero-pads relu(h); masking relu(h)
        # outside [0, L) reproduces that padding exactly at every layer.
        t = jnp.where((rows >= 0) & (rows < length), jnp.maximum(h, 0.0), 0.0).astype(cdt)
        n_out = w_i - 2
        acc = jnp.dot(t[0:n_out], wa_ref[i, 0], preferred_element_type=jnp.float32)
        acc = acc + jnp.dot(t[1:1 + n_out], wa_ref[i, 1], preferred_element_type=jnp.float32)
        acc = acc + jnp.dot(t[2:2 + n_out], wa_ref[i, 2], preferred_element_type=jnp.float32)
        blk = jnp.dot(jnp.maximum(acc, 0.0).astype(cdt), wb_ref[i],
                      preferred_element_type=jnp.float32)            # 1x1 conv
        h = h[1:1 + n_out] + blk
    out = jnp.maximum(h, 0.0) + hw[n_layers:n_layers + tile]         # relu(stack) + x5
    o_ref[0] = out.astype(o_ref.dtype)


def _stage3(x5, res_weights, *, tile, halo, cdt, out_dtype):
    B, l3, c = x5.shape
    n_layers = len(res_weights)
    if n_layers == 0:                                      # degenerate: relu(x5) + x5
        x5f = x5.astype(jnp.float32)
        return (jnp.maximum(x5f, 0.0) + x5f).astype(out_dtype)
    r = res_weights[0][0].shape[0]
    nt = _cdiv(l3, tile)
    lp = nt * tile + halo
    xp = _zero_pad_rows(x5.astype(cdt), n_layers, lp)
    wa = jnp.stack([jnp.transpose(wa_i, (2, 1, 0)) for wa_i, _ in res_weights]).astype(cdt)
    wb = jnp.stack([jnp.transpose(wb_i[:, :, 0], (1, 0)) for _, wb_i in res_weights]).astype(cdt)

    out = pl.pallas_call(
        functools.partial(_stage3_kernel, tile=tile, length=l3, n_layers=n_layers, cdt=cdt),
        out_shape=jax.ShapeDtypeStruct((B, nt * tile, c), out_dtype),
        grid=(B, nt),
        in_specs=[
            pl.BlockSpec((1, tile, c), lambda b, j: (b, j, 0)),
            pl.BlockSpec((1, halo, c), lambda b, j: (b, (j + 1) * (tile // halo), 0)),
            pl.BlockSpec((n_layers, 3, c, r), lambda b, j: (0, 0, 0, 0)),
            pl.BlockSpec((n_layers, r, c), lambda b, j: (0, 0, 0)),
        ],
        out_specs=pl.BlockSpec((1, tile, c), lambda b, j: (b, j, 0)),
        compiler_params=_compiler_params(),
    )(xp, xp, wa, wb)
    return out[:, :l3, :]


# ----------------------------------------------------------------------------
# Full forward
# ----------------------------------------------------------------------------
def convolutional_encoder_forward(x_nlc, params, *, max_tile=1024,
                                  compute_dtype=jnp.bfloat16, out_dtype=jnp.float32):
    """ConvolutionalEncoder forward.  x_nlc: (B, L, features_filters) channels-last."""
    B, L, _ = x_nlc.shape
    n_layers = len(params["res_stack"])
    sub = 8 if jnp.dtype(compute_dtype).itemsize >= 4 else 16        # sublane packing
    halo3 = _round_up(max(2 * n_layers, 1), sub)                     # res-stack halo
    t1 = _pick_tile(L, sub, max_tile)
    l3 = L // 2 + 1
    t3 = _pick_tile(l3, halo3, max_tile)                             # halo3 is a multiple of sub

    x2 = _stage1(x_nlc, params["w1"], params["b1"], params["w2"], params["b2"],
                 tile=t1, sub=sub, cdt=compute_dtype)
    x5 = _stage2(x2, params["w3"], params["b3"], params["w4"], params["b4"],
                 params["w5"], params["b5"], tile=t3, sub=sub, cdt=compute_dtype)
    return _stage3(x5, params["res_stack"], tile=t3, halo=halo3,
                   cdt=compute_dtype, out_dtype=out_dtype)


# ----------------------------------------------------------------------------
# Pure-JAX reference (PyTorch NCL semantics) for verification
# ----------------------------------------------------------------------------
def _torch_conv1d(x_ncl, w, b, stride, padding):
    out = jax.lax.conv_general_dilated(
        x_ncl, w, window_strides=(stride,), padding=[(padding, padding)],
        dimension_numbers=("NCH", "OIH", "NCH"))
    if b is not None:
        out = out + b[None, :, None]
    return out


def reference_forward(x_ncl, params):
    relu = jax.nn.relu
    x1 = relu(_torch_conv1d(x_ncl, params["w1"], params["b1"], 1, 1))
    x2 = relu(_torch_conv1d(x1, params["w2"], params["b2"], 1, 1)) + x1
    x3 = relu(_torch_conv1d(x2, params["w3"], params["b3"], 2, 2))
    x4 = relu(_torch_conv1d(x3, params["w4"], params["b4"], 1, 1)) + x3
    x5 = relu(_torch_conv1d(x4, params["w5"], params["b5"], 1, 1)) + x4
    h = x5
    for (w_a, w_b) in params["res_stack"]:
        t = relu(h)
        t = _torch_conv1d(t, w_a, None, 1, 1)
        t = relu(t)
        t = _torch_conv1d(t, w_b, None, 1, 0)
        h = h + t
    return relu(h) + x5


# ----------------------------------------------------------------------------
if __name__ == "__main__":
    B, L = 2, 64
    features_filters = 4
    num_hiddens = 32
    num_residual_layers = 2
    num_residual_hiddens = 8

    key = jax.random.PRNGKey(0)
    ks = jax.random.split(key, 16)

    def w_init(k, shape):
        return 0.1 * jax.random.normal(k, shape, jnp.float32)

    params = {
        "w1": w_init(ks[1], (num_hiddens, features_filters, 3)), "b1": w_init(ks[2], (num_hiddens,)),
        "w2": w_init(ks[3], (num_hiddens, num_hiddens, 3)),      "b2": w_init(ks[4], (num_hiddens,)),
        "w3": w_init(ks[5], (num_hiddens, num_hiddens, 4)),      "b3": w_init(ks[6], (num_hiddens,)),
        "w4": w_init(ks[7], (num_hiddens, num_hiddens, 3)),      "b4": w_init(ks[8], (num_hiddens,)),
        "w5": w_init(ks[9], (num_hiddens, num_hiddens, 3)),      "b5": w_init(ks[10], (num_hiddens,)),
        "res_stack": [
            (w_init(ks[11 + 2 * i], (num_residual_hiddens, num_hiddens, 3)),   # 3-tap conv, bias-free
             w_init(ks[12 + 2 * i], (num_hiddens, num_residual_hiddens, 1)))   # 1x1 conv, bias-free
            for i in range(num_residual_layers)
        ],
    }

    # PyTorch-style NCL input, transposed once to the kernels' NLC layout.
    x_ncl = jax.random.normal(ks[0], (B, features_filters, L), jnp.float32)
    x_nlc = jnp.transpose(x_ncl, (0, 2, 1))

    ref = jnp.transpose(reference_forward(x_ncl, params), (0, 2, 1))   # NCL -> NLC, f32

    # 1) f32 compute with small tiles: exercises multi-tile halos / boundary masks
    #    exactly (tight tolerance is the real correctness gate).
    fwd_f32 = jax.jit(functools.partial(convolutional_encoder_forward,
                                        max_tile=16, compute_dtype=jnp.float32))
    out_f32 = jax.block_until_ready(fwd_f32(x_nlc, params))
    assert out_f32.shape == ref.shape, (out_f32.shape, ref.shape)
    err_f32 = float(jnp.max(jnp.abs(out_f32 - ref)))
    assert err_f32 < 3e-4, f"f32 mismatch vs reference: {err_f32}"

    # 2) bf16 production path, tiled (bf16 activations + matmul inputs, f32 elementwise).
    fwd_bf16_t = jax.jit(functools.partial(convolutional_encoder_forward,
                                           max_tile=16, compute_dtype=jnp.bfloat16))
    out_bf16_t = jax.block_until_ready(fwd_bf16_t(x_nlc, params))
    err_bf16_t = float(jnp.max(jnp.abs(out_bf16_t - ref)))
    assert err_bf16_t < 0.2, f"bf16 (tiled) mismatch vs reference: {err_bf16_t}"

    # 3) bf16, default (single-tile-per-batch) path.
    fwd_bf16 = jax.jit(functools.partial(convolutional_encoder_forward,
                                         compute_dtype=jnp.bfloat16))
    out_bf16 = jax.block_until_ready(fwd_bf16(x_nlc, params))
    err_bf16 = float(jnp.max(jnp.abs(out_bf16 - ref)))
    assert err_bf16 < 0.2, f"bf16 mismatch vs reference: {err_bf16}"

    print("KERNEL_OK")
</pallas_src>

<mosaic_0001>
module attributes {stable_mosaic.version = 11 : i64} {
  func.func @_stage1_kernel(%arg0: i32, %arg1: i32, %arg2: memref<1x16x4xf32, #tpu.memory_space<vmem>>, %arg3: memref<1x8x4xf32, #tpu.memory_space<vmem>>, %arg4: memref<3x4x32xf32, #tpu.memory_space<vmem>>, %arg5: memref<3x32x32xf32, #tpu.memory_space<vmem>>, %arg6: memref<2x1x32xf32, #tpu.memory_space<vmem>>, %arg7: memref<1x16x32xf32, #tpu.memory_space<vmem>>) attributes {dimension_semantics = [#tpu.dimension_semantics<parallel>, #tpu.dimension_semantics<parallel>], iteration_bounds = array<i64: 2, 4>, scalar_prefetch = 0 : i64, scratch_operands = 0 : i64, tpu.core_type = #tpu.core_type<tc>, window_params = [{transform_indices = @transform_0, window_bounds = array<i64: 1, 16, 4>}, {transform_indices = @transform_1, window_bounds = array<i64: 1, 8, 4>}, {pipeline_mode = #tpu.pipeline_mode<synchronous>, transform_indices = @transform_2, window_bounds = array<i64: 3, 4, 32>}, {pipeline_mode = #tpu.pipeline_mode<synchronous>, transform_indices = @transform_3, window_bounds = array<i64: 3, 32, 32>}, {pipeline_mode = #tpu.pipeline_mode<synchronous>, transform_indices = @transform_4, window_bounds = array<i64: 2, 1, 32>}, {transform_indices = @transform_5, window_bounds = array<i64: 1, 16, 32>}]} {
    %c16_i32 = arith.constant 16 : i32
    %0 = arith.muli %arg1, %c16_i32 : i32
    %c0 = arith.constant 0 : index
    %c0_0 = arith.constant 0 : index
    %c0_1 = arith.constant 0 : index
    %1 = vector.load %arg2[%c0, %c0_0, %c0_1] : memref<1x16x4xf32, #tpu.memory_space<vmem>>, vector<1x16x4xf32>
    %2 = vector.shape_cast %1 : vector<1x16x4xf32> to vector<16x4xf32>
    %c0_2 = arith.constant 0 : index
    %c0_3 = arith.constant 0 : index
    %c0_4 = arith.constant 0 : index
    %3 = vector.load %arg3[%c0_2, %c0_3, %c0_4] : memref<1x8x4xf32, #tpu.memory_space<vmem>>, vector<1x8x4xf32>
    %4 = vector.shape_cast %3 : vector<1x8x4xf32> to vector<8x4xf32>
    %5 = tpu.concatenate %2, %4 in 0 : vector<16x4xf32>, vector<8x4xf32> -> vector<24x4xf32>
    %6 = vector.extract_strided_slice %5 {offsets = [0, 0], sizes = [18, 4], strides = [1, 1]} : vector<24x4xf32> to vector<18x4xf32>
    %c0_5 = arith.constant 0 : index
    %c0_6 = arith.constant 0 : index
    %c0_7 = arith.constant 0 : index
    %7 = vector.load %arg4[%c0_5, %c0_6, %c0_7] : memref<3x4x32xf32, #tpu.memory_space<vmem>>, vector<1x4x32xf32>
    %8 = vector.shape_cast %7 : vector<1x4x32xf32> to vector<4x32xf32>
    %cst = arith.constant dense<0.000000e+00> : vector<18x32xf32>
    %9 = tpu.matmul %6, %8, %cst {dimension_numbers = #tpu.dot_dimension_numbers<[1], [0], [0], [1], [0, 0, 1, 1], [], []>} : vector<18x4xf32>, vector<4x32xf32>, vector<18x32xf32> -> vector<18x32xf32>
    %10 = vector.extract_strided_slice %5 {offsets = [1, 0], sizes = [18, 4], strides = [1, 1]} : vector<24x4xf32> to vector<18x4xf32>
    %c1 = arith.constant 1 : index
    %c0_8 = arith.constant 0 : index
    %c0_9 = arith.constant 0 : index
    %11 = vector.load %arg4[%c1, %c0_8, %c0_9] : memref<3x4x32xf32, #tpu.memory_space<vmem>>, vector<1x4x32xf32>
    %12 = vector.shape_cast %11 : vector<1x4x32xf32> to vector<4x32xf32>
    %cst_10 = arith.constant dense<0.000000e+00> : vector<18x32xf32>
    %13 = tpu.matmul %10, %12, %cst_10 {dimension_numbers = #tpu.dot_dimension_numbers<[1], [0], [0], [1], [0, 0, 1, 1], [], []>} : vector<18x4xf32>, vector<4x32xf32>, vector<18x32xf32> -> vector<18x32xf32>
    %14 = arith.addf %9, %13 : vector<18x32xf32>
    %15 = vector.extract_strided_slice %5 {offsets = [2, 0], sizes = [18, 4], strides = [1, 1]} : vector<24x4xf32> to vector<18x4xf32>
    %c2 = arith.constant 2 : index
    %c0_11 = arith.constant 0 : index
    %c0_12 = arith.constant 0 : index
    %16 = vector.load %arg4[%c2, %c0_11, %c0_12] : memref<3x4x32xf32, #tpu.memory_space<vmem>>, vector<1x4x32xf32>
    %17 = vector.shape_cast %16 : vector<1x4x32xf32> to vector<4x32xf32>
    %cst_13 = arith.constant dense<0.000000e+00> : vector<18x32xf32>
    %18 = tpu.matmul %15, %17, %cst_13 {dimension_numbers = #tpu.dot_dimension_numbers<[1], [0], [0], [1], [0, 0, 1, 1], [], []>} : vector<18x4xf32>, vector<4x32xf32>, vector<18x32xf32> -> vector<18x32xf32>
    %19 = arith.addf %14, %18 : vector<18x32xf32>
    %c0_14 = arith.constant 0 : index
    %c0_15 = arith.constant 0 : index
    %c0_16 = arith.constant 0 : index
    %20 = vector.load %arg6[%c0_14, %c0_15, %c0_16] : memref<2x1x32xf32, #tpu.memory_space<vmem>>, vector<1x1x32xf32>
    %21 = vector.shape_cast %20 : vector<1x1x32xf32> to vector<1x32xf32>
    %22 = vector.broadcast %21 : vector<1x32xf32> to vector<18x32xf32>
    %23 = arith.addf %19, %22 : vector<18x32xf32>
    %cst_17 = arith.constant 0.000000e+00 : f32
    %24 = vector.broadcast %cst_17 : f32 to vector<18x32xf32>
    %25 = arith.maximumf %23, %24 : vector<18x32xf32>
    %c1_i32 = arith.constant 1 : i32
    %26 = arith.subi %0, %c1_i32 : i32
    %27 = tpu.iota {dimensions = array<i32: 0>} : vector<18x1xi32>
    %28 = vector.broadcast %26 : i32 to vector<18x1xi32>
    %29 = arith.addi %27, %28 : vector<18x1xi32>
    %c0_i32 = arith.constant 0 : i32
    %30 = vector.broadcast %c0_i32 : i32 to vector<18x1xi32>
    %31 = arith.cmpi sge, %29, %30 : vector<18x1xi32>
    %c64_i32 = arith.constant 64 : i32
    %32 = vector.broadcast %c64_i32 : i32 to vector<18x1xi32>
    %33 = arith.cmpi slt, %29, %32 : vector<18x1xi32>
    %34 = arith.andi %31, %33 : vector<18x1xi1>
    %cst_18 = arith.constant 0.000000e+00 : f32
    %35 = vector.shape_cast %34 : vector<18x1xi1> to vector<18x1xi1>
    %36 = vector.broadcast %35 : vector<18x1xi1> to vector<18x32xi1>
    %37 = vector.broadcast %cst_18 : f32 to vector<18x32xf32>
    %38 = arith.select %36, %25, %37 : vector<18x32xi1>, vector<18x32xf32>
    %39 = vector.extract_strided_slice %38 {offsets = [0, 0], sizes = [16, 32], strides = [1, 1]} : vector<18x32xf32> to vector<16x32xf32>
    %c0_19 = arith.constant 0 : index
    %c0_20 = arith.constant 0 : index
    %c0_21 = arith.constant 0 : index
    %40 = vector.load %arg5[%c0_19, %c0_20, %c0_21] : memref<3x32x32xf32, #tpu.memory_space<vmem>>, vector<1x32x32xf32>
    %41 = vector.shape_cast %40 : vector<1x32x32xf32> to vector<32x32xf32>
    %cst_22 = arith.constant dense<0.000000e+00> : vector<16x32xf32>
    %42 = tpu.matmul %39, %41, %cst_22 {dimension_numbers = #tpu.dot_dimension_numbers<[1], [0], [0], [1], [0, 0, 1, 1], [], []>} : vector<16x32xf32>, vector<32x32xf32>, vector<16x32xf32> -> vector<16x32xf32>
    %43 = vector.extract_strided_slice %38 {offsets = [1, 0], sizes = [16, 32], strides = [1, 1]} : vector<18x32xf32> to vector<16x32xf32>
    %c1_23 = arith.constant 1 : index
    %c0_24 = arith.constant 0 : index
    %c0_25 = arith.constant 0 : index
    %44 = vector.load %arg5[%c1_23, %c0_24, %c0_25] : memref<3x32x32xf32, #tpu.memory_space<vmem>>, vector<1x32x32xf32>
    %45 = vector.shape_cast %44 : vector<1x32x32xf32> to vector<32x32xf32>
    %cst_26 = arith.constant dense<0.000000e+00> : vector<16x32xf32>
    %46 = tpu.matmul %43, %45, %cst_26 {dimension_numbers = #tpu.dot_dimension_numbers<[1], [0], [0], [1], [0, 0, 1, 1], [], []>} : vector<16x32xf32>, vector<32x32xf32>, vector<16x32xf32> -> vector<16x32xf32>
    %47 = arith.addf %42, %46 : vector<16x32xf32>
    %48 = vector.extract_strided_slice %38 {offsets = [2, 0], sizes = [16, 32], strides = [1, 1]} : vector<18x32xf32> to vector<16x32xf32>
    %c2_27 = arith.constant 2 : index
    %c0_28 = arith.constant 0 : index
    %c0_29 = arith.constant 0 : index
    %49 = vector.load %arg5[%c2_27, %c0_28, %c0_29] : memref<3x32x32xf32, #tpu.memory_space<vmem>>, vector<1x32x32xf32>
    %50 = vector.shape_cast %49 : vector<1x32x32xf32> to vector<32x32xf32>
    %cst_30 = arith.constant dense<0.000000e+00> : vector<16x32xf32>
    %51 = tpu.matmul %48, %50, %cst_30 {dimension_numbers = #tpu.dot_dimension_numbers<[1], [0], [0], [1], [0, 0, 1, 1], [], []>} : vector<16x32xf32>, vector<32x32xf32>, vector<16x32xf32> -> vector<16x32xf32>
    %52 = arith.addf %47, %51 : vector<16x32xf32>
    %c1_31 = arith.constant 1 : index
    %c0_32 = arith.constant 0 : index
    %c0_33 = arith.constant 0 : index
    %53 = vector.load %arg6[%c1_31, %c0_32, %c0_33] : memref<2x1x32xf32, #tpu.memory_space<vmem>>, vector<1x1x32xf32>
    %54 = vector.shape_cast %53 : vector<1x1x32xf32> to vector<1x32xf32>
    %55 = vector.broadcast %54 : vector<1x32xf32> to vector<16x32xf32>
    %56 = arith.addf %52, %55 : vector<16x32xf32>
    %cst_34 = arith.constant 0.000000e+00 : f32
    %57 = vector.broadcast %cst_34 : f32 to vector<16x32xf32>
    %58 = arith.maximumf %56, %57 : vector<16x32xf32>
    %59 = vector.extract_strided_slice %38 {offsets = [1, 0], sizes = [16, 32], strides = [1, 1]} : vector<18x32xf32> to vector<16x32xf32>
    %60 = arith.addf %58, %59 : vector<16x32xf32>
    %c0_35 = arith.constant 0 : index
    %c0_36 = arith.constant 0 : index
    %c0_37 = arith.constant 0 : index
    %61 = vector.load %arg7[%c0_35, %c0_36, %c0_37] : memref<1x16x32xf32, #tpu.memory_space<vmem>>, vector<1x16x32xf32>
    %62 = vector.shape_cast %61 : vector<1x16x32xf32> to vector<16x32xf32>
    %63 = vector.shape_cast %60 : vector<16x32xf32> to vector<1x16x32xf32>
    tpu.vector_store %arg7[%c0_35, %c0_36, %c0_37], %63 {strides = array<i32>} : memref<1x16x32xf32, #tpu.memory_space<vmem>>, vector<1x16x32xf32>,
    return
  }
  func.func @transform_0(%arg0: i32, %arg1: i32) -> (i32, i32, i32) {
    %c0_i32 = arith.constant 0 : i32
    %c0_i32_0 = arith.constant 0 : i32
    return %arg0, %arg1, %c0_i32 : i32, i32, i32
  }
  func.func @transform_1(%arg0: i32, %arg1: i32) -> (i32, i32, i32) {
    %c1_i32 = arith.constant 1 : i32
    %0 = arith.addi %arg1, %c1_i32 : i32
    %c2_i32 = arith.constant 2 : i32
    %1 = arith.muli %0, %c2_i32 : i32
    %c0_i32 = arith.constant 0 : i32
    %c0_i32_0 = arith.constant 0 : i32
    return %arg0, %1, %c0_i32 : i32, i32, i32
  }
  func.func @transform_2(%arg0: i32, %arg1: i32) -> (i32, i32, i32) {
    %c0_i32 = arith.constant 0 : i32
    %c0_i32_0 = arith.constant 0 : i32
    %c0_i32_1 = arith.constant 0 : i32
    %c0_i32_2 = arith.constant 0 : i32
    return %c0_i32, %c0_i32_0, %c0_i32_1 : i32, i32, i32
  }
  func.func @transform_3(%arg0: i32, %arg1: i32) -> (i32, i32, i32) {
    %c0_i32 = arith.constant 0 : i32
    %c0_i32_0 = arith.constant 0 : i32
    %c0_i32_1 = arith.constant 0 : i32
    %c0_i32_2 = arith.constant 0 : i32
    return %c0_i32, %c0_i32_0, %c0_i32_1 : i32, i32, i32
  }
  func.func @transform_4(%arg0: i32, %arg1: i32) -> (i32, i32, i32) {
    %c0_i32 = arith.constant 0 : i32
    %c0_i32_0 = arith.constant 0 : i32
    %c0_i32_1 = arith.constant 0 : i32
    %c0_i32_2 = arith.constant 0 : i32
    return %c0_i32, %c0_i32_0, %c0_i32_1 : i32, i32, i32
  }
  func.func @transform_5(%arg0: i32, %arg1: i32) -> (i32, i32, i32) {
    %c0_i32 = arith.constant 0 : i32
    %c0_i32_0 = arith.constant 0 : i32
    return %arg0, %arg1, %c0_i32 : i32, i32, i32
  }
}

module attributes {stable_mosaic.version = 11 : i64} {
  func.func @_stage2_kernel(%arg0: i32, %arg1: i32, %arg2: memref<1x16x64xf32, #tpu.memory_space<vmem>>, %arg3: memref<1x8x64xf32, #tpu.memory_space<vmem>>, %arg4: memref<2x64x32xf32, #tpu.memory_space<vmem>>, %arg5: memref<3x32x32xf32, #tpu.memory_space<vmem>>, %arg6: memref<3x32x32xf32, #tpu.memory_space<vmem>>, %arg7: memref<3x1x32xf32, #tpu.memory_space<vmem>>, %arg8: memref<1x16x32xf32, #tpu.memory_space<vmem>>) attributes {dimension_semantics = [#tpu.dimension_semantics<parallel>, #tpu.dimension_semantics<parallel>], iteration_bounds = array<i64: 2, 3>, scalar_prefetch = 0 : i64, scratch_operands = 0 : i64, tpu.core_type = #tpu.core_type<tc>, window_params = [{transform_indices = @transform_0, window_bounds = array<i64: 1, 16, 64>}, {transform_indices = @transform_1, window_bounds = array<i64: 1, 8, 64>}, {pipeline_mode = #tpu.pipeline_mode<synchronous>, transform_indices = @transform_2, window_bounds = array<i64: 2, 64, 32>}, {pipeline_mode = #tpu.pipeline_mode<synchronous>, transform_indices = @transform_3, window_bounds = array<i64: 3, 32, 32>}, {pipeline_mode = #tpu.pipeline_mode<synchronous>, transform_indices = @transform_4, window_bounds = array<i64: 3, 32, 32>}, {pipeline_mode = #tpu.pipeline_mode<synchronous>, transform_indices = @transform_5, window_bounds = array<i64: 3, 1, 32>}, {transform_indices = @transform_6, window_bounds = array<i64: 1, 16, 32>}]} {
    %c16_i32 = arith.constant 16 : i32
    %0 = arith.muli %arg1, %c16_i32 : i32
    %c0 = arith.constant 0 : index
    %c0_0 = arith.constant 0 : index
    %c0_1 = arith.constant 0 : index
    %1 = vector.load %arg2[%c0, %c0_0, %c0_1] : memref<1x16x64xf32, #tpu.memory_space<vmem>>, vector<1x16x64xf32>
    %2 = vector.shape_cast %1 : vector<1x16x64xf32> to vector<16x64xf32>
    %c0_2 = arith.constant 0 : index
    %c0_3 = arith.constant 0 : index
    %c0_4 = arith.constant 0 : index
    %3 = vector.load %arg3[%c0_2, %c0_3, %c0_4] : memref<1x8x64xf32, #tpu.memory_space<vmem>>, vector<1x8x64xf32>
    %4 = vector.shape_cast %3 : vector<1x8x64xf32> to vector<8x64xf32>
    %5 = tpu.concatenate %2, %4 in 0 : vector<16x64xf32>, vector<8x64xf32> -> vector<24x64xf32>
    %6 = vector.extract_strided_slice %5 {offsets = [0, 0], sizes = [20, 64], strides = [1, 1]} : vector<24x64xf32> to vector<20x64xf32>
    %c0_5 = arith.constant 0 : index
    %c0_6 = arith.constant 0 : index
    %c0_7 = arith.constant 0 : index
    %7 = vector.load %arg4[%c0_5, %c0_6, %c0_7] : memref<2x64x32xf32, #tpu.memory_space<vmem>>, vector<1x64x32xf32>
    %8 = vector.shape_cast %7 : vector<1x64x32xf32> to vector<64x32xf32>
    %cst = arith.constant dense<0.000000e+00> : vector<20x32xf32>
    %9 = tpu.matmul %6, %8, %cst {dimension_numbers = #tpu.dot_dimension_numbers<[1], [0], [0], [1], [0, 0, 1, 1], [], []>} : vector<20x64xf32>, vector<64x32xf32>, vector<20x32xf32> -> vector<20x32xf32>
    %10 = vector.extract_strided_slice %5 {offsets = [1, 0], sizes = [20, 64], strides = [1, 1]} : vector<24x64xf32> to vector<20x64xf32>
    %c1 = arith.constant 1 : index
    %c0_8 = arith.constant 0 : index
    %c0_9 = arith.constant 0 : index
    %11 = vector.load %arg4[%c1, %c0_8, %c0_9] : memref<2x64x32xf32, #tpu.memory_space<vmem>>, vector<1x64x32xf32>
    %12 = vector.shape_cast %11 : vector<1x64x32xf32> to vector<64x32xf32>
    %cst_10 = arith.constant dense<0.000000e+00> : vector<20x32xf32>
    %13 = tpu.matmul %10, %12, %cst_10 {dimension_numbers = #tpu.dot_dimension_numbers<[1], [0], [0], [1], [0, 0, 1, 1], [], []>} : vector<20x64xf32>, vector<64x32xf32>, vector<20x32xf32> -> vector<20x32xf32>
    %14 = arith.addf %9, %13 : vector<20x32xf32>
    %c0_11 = arith.constant 0 : index
    %c0_12 = arith.constant 0 : index
    %c0_13 = arith.constant 0 : index
    %15 = vector.load %arg7[%c0_11, %c0_12, %c0_13] : memref<3x1x32xf32, #tpu.memory_space<vmem>>, vector<1x1x32xf32>
    %16 = vector.shape_cast %15 : vector<1x1x32xf32> to vector<1x32xf32>
    %17 = vector.broadcast %16 : vector<1x32xf32> to vector<20x32xf32>
    %18 = arith.addf %14, %17 : vector<20x32xf32>
    %cst_14 = arith.constant 0.000000e+00 : f32
    %19 = vector.broadcast %cst_14 : f32 to vector<20x32xf32>
    %20 = arith.maximumf %18, %19 : vector<20x32xf32>
    %c2_i32 = arith.constant 2 : i32
    %21 = arith.subi %0, %c2_i32 : i32
    %22 = tpu.iota {dimensions = array<i32: 0>} : vector<20x1xi32>
    %23 = vector.broadcast %21 : i32 to vector<20x1xi32>
    %24 = arith.addi %22, %23 : vector<20x1xi32>
    %c0_i32 = arith.constant 0 : i32
    %25 = vector.broadcast %c0_i32 : i32 to vector<20x1xi32>
    %26 = arith.cmpi sge, %24, %25 : vector<20x1xi32>
    %c33_i32 = arith.constant 33 : i32
    %27 = vector.broadcast %c33_i32 : i32 to vector<20x1xi32>
    %28 = arith.cmpi slt, %24, %27 : vector<20x1xi32>
    %29 = arith.andi %26, %28 : vector<20x1xi1>
    %cst_15 = arith.constant 0.000000e+00 : f32
    %30 = vector.shape_cast %29 : vector<20x1xi1> to vector<20x1xi1>
    %31 = vector.broadcast %30 : vector<20x1xi1> to vector<20x32xi1>
    %32 = vector.broadcast %cst_15 : f32 to vector<20x32xf32>
    %33 = arith.select %31, %20, %32 : vector<20x32xi1>, vector<20x32xf32>
    %34 = vector.extract_strided_slice %33 {offsets = [0, 0], sizes = [18, 32], strides = [1, 1]} : vector<20x32xf32> to vector<18x32xf32>
    %c0_16 = arith.constant 0 : index
    %c0_17 = arith.constant 0 : index
    %c0_18 = arith.constant 0 : index
    %35 = vector.load %arg5[%c0_16, %c0_17, %c0_18] : memref<3x32x32xf32, #tpu.memory_space<vmem>>, vector<1x32x32xf32>
    %36 = vector.shape_cast %35 : vector<1x32x32xf32> to vector<32x32xf32>
    %cst_19 = arith.constant dense<0.000000e+00> : vector<18x32xf32>
    %37 = tpu.matmul %34, %36, %cst_19 {dimension_numbers = #tpu.dot_dimension_numbers<[1], [0], [0], [1], [0, 0, 1, 1], [], []>} : vector<18x32xf32>, vector<32x32xf32>, vector<18x32xf32> -> vector<18x32xf32>
    %38 = vector.extract_strided_slice %33 {offsets = [1, 0], sizes = [18, 32], strides = [1, 1]} : vector<20x32xf32> to vector<18x32xf32>
    %c1_20 = arith.constant 1 : index
    %c0_21 = arith.constant 0 : index
    %c0_22 = arith.constant 0 : index
    %39 = vector.load %arg5[%c1_20, %c0_21, %c0_22] : memref<3x32x32xf32, #tpu.memory_space<vmem>>, vector<1x32x32xf32>
    %40 = vector.shape_cast %39 : vector<1x32x32xf32> to vector<32x32xf32>
    %cst_23 = arith.constant dense<0.000000e+00> : vector<18x32xf32>
    %41 = tpu.matmul %38, %40, %cst_23 {dimension_numbers = #tpu.dot_dimension_numbers<[1], [0], [0], [1], [0, 0, 1, 1], [], []>} : vector<18x32xf32>, vector<32x32xf32>, vector<18x32xf32> -> vector<18x32xf32>
    %42 = arith.addf %37, %41 : vector<18x32xf32>
    %43 = vector.extract_strided_slice %33 {offsets = [2, 0], sizes = [18, 32], strides = [1, 1]} : vector<20x32xf32> to vector<18x32xf32>
    %c2 = arith.constant 2 : index
    %c0_24 = arith.constant 0 : index
    %c0_25 = arith.constant 0 : index
    %44 = vector.load %arg5[%c2, %c0_24, %c0_25] : memref<3x32x32xf32, #tpu.memory_space<vmem>>, vector<1x32x32xf32>
    %45 = vector.shape_cast %44 : vector<1x32x32xf32> to vector<32x32xf32>
    %cst_26 = arith.constant dense<0.000000e+00> : vector<18x32xf32>
    %46 = tpu.matmul %43, %45, %cst_26 {dimension_numbers = #tpu.dot_dimension_numbers<[1], [0], [0], [1], [0, 0, 1, 1], [], []>} : vector<18x32xf32>, vector<32x32xf32>, vector<18x32xf32> -> vector<18x32xf32>
    %47 = arith.addf %42, %46 : vector<18x32xf32>
    %c1_27 = arith.constant 1 : index
    %c0_28 = arith.constant 0 : index
    %c0_29 = arith.constant 0 : index
    %48 = vector.load %arg7[%c1_27, %c0_28, %c0_29] : memref<3x1x32xf32, #tpu.memory_space<vmem>>, vector<1x1x32xf32>
    %49 = vector.shape_cast %48 : vector<1x1x32xf32> to vector<1x32xf32>
    %50 = vector.broadcast %49 : vector<1x32xf32> to vector<18x32xf32>
    %51 = arith.addf %47, %50 : vector<18x32xf32>
    %cst_30 = arith.constant 0.000000e+00 : f32
    %52 = vector.broadcast %cst_30 : f32 to vector<18x32xf32>
    %53 = arith.maximumf %51, %52 : vector<18x32xf32>
    %54 = vector.extract_strided_slice %33 {offsets = [1, 0], sizes = [18, 32], strides = [1, 1]} : vector<20x32xf32> to vector<18x32xf32>
    %55 = arith.addf %53, %54 : vector<18x32xf32>
    %c1_i32 = arith.constant 1 : i32
    %56 = arith.subi %0, %c1_i32 : i32
    %57 = tpu.iota {dimensions = array<i32: 0>} : vector<18x1xi32>
    %58 = vector.broadcast %56 : i32 to vector<18x1xi32>
    %59 = arith.addi %57, %58 : vector<18x1xi32>
    %c0_i32_31 = arith.constant 0 : i32
    %60 = vector.broadcast %c0_i32_31 : i32 to vector<18x1xi32>
    %61 = arith.cmpi sge, %59, %60 : vector<18x1xi32>
    %c33_i32_32 = arith.constant 33 : i32
    %62 = vector.broadcast %c33_i32_32 : i32 to vector<18x1xi32>
    %63 = arith.cmpi slt, %59, %62 : vector<18x1xi32>
    %64 = arith.andi %61, %63 : vector<18x1xi1>
    %cst_33 = arith.constant 0.000000e+00 : f32
    %65 = vector.shape_cast %64 : vector<18x1xi1> to vector<18x1xi1>
    %66 = vector.broadcast %65 : vector<18x1xi1> to vector<18x32xi1>
    %67 = vector.broadcast %cst_33 : f32 to vector<18x32xf32>
    %68 = arith.select %66, %55, %67 : vector<18x32xi1>, vector<18x32xf32>
    %69 = vector.extract_strided_slice %68 {offsets = [0, 0], sizes = [16, 32], strides = [1, 1]} : vector<18x32xf32> to vector<16x32xf32>
    %c0_34 = arith.constant 0 : index
    %c0_35 = arith.constant 0 : index
    %c0_36 = arith.constant 0 : index
    %70 = vector.load %arg6[%c0_34, %c0_35, %c0_36] : memref<3x32x32xf32, #tpu.memory_space<vmem>>, vector<1x32x32xf32>
    %71 = vector.shape_cast %70 : vector<1x32x32xf32> to vector<32x32xf32>
    %cst_37 = arith.constant dense<0.000000e+00> : vector<16x32xf32>
    %72 = tpu.matmul %69, %71, %cst_37 {dimension_numbers = #tpu.dot_dimension_numbers<[1], [0], [0], [1], [0, 0, 1, 1], [], []>} : vector<16x32xf32>, vector<32x32xf32>, vector<16x32xf32> -> vector<16x32xf32>
    %73 = vector.extract_strided_slice %68 {offsets = [1, 0], sizes = [16, 32], strides = [1, 1]} : vector<18x32xf32> to vector<16x32xf32>
    %c1_38 = arith.constant 1 : index
    %c0_39 = arith.constant 0 : index
    %c0_40 = arith.constant 0 : index
    %74 = vector.load %arg6[%c1_38, %c0_39, %c0_40] : memref<3x32x32xf32, #tpu.memory_space<vmem>>, vector<1x32x32xf32>
    %75 = vector.shape_cast %74 : vector<1x32x32xf32> to vector<32x32xf32>
    %cst_41 = arith.constant dense<0.000000e+00> : vector<16x32xf32>
    %76 = tpu.matmul %73, %75, %cst_41 {dimension_numbers = #tpu.dot_dimension_numbers<[1], [0], [0], [1], [0, 0, 1, 1], [], []>} : vector<16x32xf32>, vector<32x32xf32>, vector<16x32xf32> -> vector<16x32xf32>
    %77 = arith.addf %72, %76 : vector<16x32xf32>
    %78 = vector.extract_strided_slice %68 {offsets = [2, 0], sizes = [16, 32], strides = [1, 1]} : vector<18x32xf32> to vector<16x32xf32>
    %c2_42 = arith.constant 2 : index
    %c0_43 = arith.constant 0 : index
    %c0_44 = arith.constant 0 : index
    %79 = vector.load %arg6[%c2_42, %c0_43, %c0_44] : memref<3x32x32xf32, #tpu.memory_space<vmem>>, vector<1x32x32xf32>
    %80 = vector.shape_cast %79 : vector<1x32x32xf32> to vector<32x32xf32>
    %cst_45 = arith.constant dense<0.000000e+00> : vector<16x32xf32>
    %81 = tpu.matmul %78, %80, %cst_45 {dimension_numbers = #tpu.dot_dimension_numbers<[1], [0], [0], [1], [0, 0, 1, 1], [], []>} : vector<16x32xf32>, vector<32x32xf32>, vector<16x32xf32> -> vector<16x32xf32>
    %82 = arith.addf %77, %81 : vector<16x32xf32>
    %c2_46 = arith.constant 2 : index
    %c0_47 = arith.constant 0 : index
    %c0_48 = arith.constant 0 : index
    %83 = vector.load %arg7[%c2_46, %c0_47, %c0_48] : memref<3x1x32xf32, #tpu.memory_space<vmem>>, vector<1x1x32xf32>
    %84 = vector.shape_cast %83 : vector<1x1x32xf32> to vector<1x32xf32>
    %85 = vector.broadcast %84 : vector<1x32xf32> to vector<16x32xf32>
    %86 = arith.addf %82, %85 : vector<16x32xf32>
    %cst_49 = arith.constant 0.000000e+00 : f32
    %87 = vector.broadcast %cst_49 : f32 to vector<16x32xf32>
    %88 = arith.maximumf %86, %87 : vector<16x32xf32>
    %89 = vector.extract_strided_slice %68 {offsets = [1, 0], sizes = [16, 32], strides = [1, 1]} : vector<18x32xf32> to vector<16x32xf32>
    %90 = arith.addf %88, %89 : vector<16x32xf32>
    %c0_50 = arith.constant 0 : index
    %c0_51 = arith.constant 0 : index
    %c0_52 = arith.constant 0 : index
    %91 = vector.load %arg8[%c0_50, %c0_51, %c0_52] : memref<1x16x32xf32, #tpu.memory_space<vmem>>, vector<1x16x32xf32>
    %92 = vector.shape_cast %91 : vector<1x16x32xf32> to vector<16x32xf32>
    %93 = vector.shape_cast %90 : vector<16x32xf32> to vector<1x16x32xf32>
    tpu.vector_store %arg8[%c0_50, %c0_51, %c0_52], %93 {strides = array<i32>} : memref<1x16x32xf32, #tpu.memory_space<vmem>>, vector<1x16x32xf32>,
    return
  }
  func.func @transform_0(%arg0: i32, %arg1: i32) -> (i32, i32, i32) {
    %c0_i32 = arith.constant 0 : i32
    %c0_i32_0 = arith.constant 0 : i32
    return %arg0, %arg1, %c0_i32 : i32, i32, i32
  }
  func.func @transform_1(%arg0: i32, %arg1: i32) -> (i32, i32, i32) {
    %c1_i32 = arith.constant 1 : i32
    %0 = arith.addi %arg1, %c1_i32 : i32
    %c2_i32 = arith.constant 2 : i32
    %1 = arith.muli %0, %c2_i32 : i32
    %c0_i32 = arith.constant 0 : i32
    %c0_i32_0 = arith.constant 0 : i32
    return %arg0, %1, %c0_i32 : i32, i32, i32
  }
  func.func @transform_2(%arg0: i32, %arg1: i32) -> (i32, i32, i32) {
    %c0_i32 = arith.constant 0 : i32
    %c0_i32_0 = arith.constant 0 : i32
    %c0_i32_1 = arith.constant 0 : i32
    %c0_i32_2 = arith.constant 0 : i32
    return %c0_i32, %c0_i32_0, %c0_i32_1 : i32, i32, i32
  }
  func.func @transform_3(%arg0: i32, %arg1: i32) -> (i32, i32, i32) {
    %c0_i32 = arith.constant 0 : i32
    %c0_i32_0 = arith.constant 0 : i32
    %c0_i32_1 = arith.constant 0 : i32
    %c0_i32_2 = arith.constant 0 : i32
    return %c0_i32, %c0_i32_0, %c0_i32_1 : i32, i32, i32
  }
  func.func @transform_4(%arg0: i32, %arg1: i32) -> (i32, i32, i32) {
    %c0_i32 = arith.constant 0 : i32
    %c0_i32_0 = arith.constant 0 : i32
    %c0_i32_1 = arith.constant 0 : i32
    %c0_i32_2 = arith.constant 0 : i32
    return %c0_i32, %c0_i32_0, %c0_i32_1 : i32, i32, i32
  }
  func.func @transform_5(%arg0: i32, %arg1: i32) -> (i32, i32, i32) {
    %c0_i32 = arith.constant 0 : i32
    %c0_i32_0 = arith.constant 0 : i32
    %c0_i32_1 = arith.constant 0 : i32
    %c0_i32_2 = arith.constant 0 : i32
    return %c0_i32, %c0_i32_0, %c0_i32_1 : i32, i32, i32
  }
  func.func @transform_6(%arg0: i32, %arg1: i32) -> (i32, i32, i32) {
    %c0_i32 = arith.constant 0 : i32
    %c0_i32_0 = arith.constant 0 : i32
    return %arg0, %arg1, %c0_i32 : i32, i32, i32
  }
}

module attributes {stable_mosaic.version = 11 : i64} {
  func.func @_stage3_kernel(%arg0: i32, %arg1: i32, %arg2: memref<1x16x32xf32, #tpu.memory_space<vmem>>, %arg3: memref<1x8x32xf32, #tpu.memory_space<vmem>>, %arg4: memref<2x3x32x8xf32, #tpu.memory_space<vmem>>, %arg5: memref<2x8x32xf32, #tpu.memory_space<vmem>>, %arg6: memref<1x16x32xf32, #tpu.memory_space<vmem>>) attributes {dimension_semantics = [#tpu.dimension_semantics<parallel>, #tpu.dimension_semantics<parallel>], iteration_bounds = array<i64: 2, 3>, scalar_prefetch = 0 : i64, scratch_operands = 0 : i64, tpu.core_type = #tpu.core_type<tc>, window_params = [{transform_indices = @transform_0, window_bounds = array<i64: 1, 16, 32>}, {transform_indices = @transform_1, window_bounds = array<i64: 1, 8, 32>}, {pipeline_mode = #tpu.pipeline_mode<synchronous>, transform_indices = @transform_2, window_bounds = array<i64: 2, 3, 32, 8>}, {pipeline_mode = #tpu.pipeline_mode<synchronous>, transform_indices = @transform_3, window_bounds = array<i64: 2, 8, 32>}, {transform_indices = @transform_4, window_bounds = array<i64: 1, 16, 32>}]} {
    %c16_i32 = arith.constant 16 : i32
    %0 = arith.muli %arg1, %c16_i32 : i32
    %c0 = arith.constant 0 : index
    %c0_0 = arith.constant 0 : index
    %c0_1 = arith.constant 0 : index
    %1 = vector.load %arg2[%c0, %c0_0, %c0_1] : memref<1x16x32xf32, #tpu.memory_space<vmem>>, vector<1x16x32xf32>
    %2 = vector.shape_cast %1 : vector<1x16x32xf32> to vector<16x32xf32>
    %c0_2 = arith.constant 0 : index
    %c0_3 = arith.constant 0 : index
    %c0_4 = arith.constant 0 : index
    %3 = vector.load %arg3[%c0_2, %c0_3, %c0_4] : memref<1x8x32xf32, #tpu.memory_space<vmem>>, vector<1x8x32xf32>
    %4 = vector.shape_cast %3 : vector<1x8x32xf32> to vector<8x32xf32>
    %5 = tpu.concatenate %2, %4 in 0 : vector<16x32xf32>, vector<8x32xf32> -> vector<24x32xf32>
    %6 = vector.extract_strided_slice %5 {offsets = [0, 0], sizes = [20, 32], strides = [1, 1]} : vector<24x32xf32> to vector<20x32xf32>
    %c2_i32 = arith.constant 2 : i32
    %7 = arith.subi %0, %c2_i32 : i32
    %8 = tpu.iota {dimensions = array<i32: 0>} : vector<20x1xi32>
    %9 = vector.broadcast %7 : i32 to vector<20x1xi32>
    %10 = arith.addi %8, %9 : vector<20x1xi32>
    %c0_i32 = arith.constant 0 : i32
    %11 = vector.broadcast %c0_i32 : i32 to vector<20x1xi32>
    %12 = arith.cmpi sge, %10, %11 : vector<20x1xi32>
    %c33_i32 = arith.constant 33 : i32
    %13 = vector.broadcast %c33_i32 : i32 to vector<20x1xi32>
    %14 = arith.cmpi slt, %10, %13 : vector<20x1xi32>
    %15 = arith.andi %12, %14 : vector<20x1xi1>
    %cst = arith.constant 0.000000e+00 : f32
    %16 = vector.broadcast %cst : f32 to vector<20x32xf32>
    %17 = arith.maximumf %6, %16 : vector<20x32xf32>
    %cst_5 = arith.constant 0.000000e+00 : f32
    %18 = vector.shape_cast %15 : vector<20x1xi1> to vector<20x1xi1>
    %19 = vector.broadcast %18 : vector<20x1xi1> to vector<20x32xi1>
    %20 = vector.broadcast %cst_5 : f32 to vector<20x32xf32>
    %21 = arith.select %19, %17, %20 : vector<20x32xi1>, vector<20x32xf32>
    %22 = vector.extract_strided_slice %21 {offsets = [0, 0], sizes = [18, 32], strides = [1, 1]} : vector<20x32xf32> to vector<18x32xf32>
    %c0_6 = arith.constant 0 : index
    %c0_7 = arith.constant 0 : index
    %c0_8 = arith.constant 0 : index
    %c0_9 = arith.constant 0 : index
    %23 = vector.load %arg4[%c0_6, %c0_7, %c0_8, %c0_9] : memref<2x3x32x8xf32, #tpu.memory_space<vmem>>, vector<1x1x32x8xf32>
    %24 = vector.shape_cast %23 : vector<1x1x32x8xf32> to vector<32x8xf32>
    %cst_10 = arith.constant dense<0.000000e+00> : vector<18x8xf32>
    %25 = tpu.matmul %22, %24, %cst_10 {dimension_numbers = #tpu.dot_dimension_numbers<[1], [0], [0], [1], [0, 0, 1, 1], [], []>} : vector<18x32xf32>, vector<32x8xf32>, vector<18x8xf32> -> vector<18x8xf32>
    %26 = vector.extract_strided_slice %21 {offsets = [1, 0], sizes = [18, 32], strides = [1, 1]} : vector<20x32xf32> to vector<18x32xf32>
    %c0_11 = arith.constant 0 : index
    %c1 = arith.constant 1 : index
    %c0_12 = arith.constant 0 : index
    %c0_13 = arith.constant 0 : index
    %27 = vector.load %arg4[%c0_11, %c1, %c0_12, %c0_13] : memref<2x3x32x8xf32, #tpu.memory_space<vmem>>, vector<1x1x32x8xf32>
    %28 = vector.shape_cast %27 : vector<1x1x32x8xf32> to vector<32x8xf32>
    %cst_14 = arith.constant dense<0.000000e+00> : vector<18x8xf32>
    %29 = tpu.matmul %26, %28, %cst_14 {dimension_numbers = #tpu.dot_dimension_numbers<[1], [0], [0], [1], [0, 0, 1, 1], [], []>} : vector<18x32xf32>, vector<32x8xf32>, vector<18x8xf32> -> vector<18x8xf32>
    %30 = arith.addf %25, %29 : vector<18x8xf32>
    %31 = vector.extract_strided_slice %21 {offsets = [2, 0], sizes = [18, 32], strides = [1, 1]} : vector<20x32xf32> to vector<18x32xf32>
    %c0_15 = arith.constant 0 : index
    %c2 = arith.constant 2 : index
    %c0_16 = arith.constant 0 : index
    %c0_17 = arith.constant 0 : index
    %32 = vector.load %arg4[%c0_15, %c2, %c0_16, %c0_17] : memref<2x3x32x8xf32, #tpu.memory_space<vmem>>, vector<1x1x32x8xf32>
    %33 = vector.shape_cast %32 : vector<1x1x32x8xf32> to vector<32x8xf32>
    %cst_18 = arith.constant dense<0.000000e+00> : vector<18x8xf32>
    %34 = tpu.matmul %31, %33, %cst_18 {dimension_numbers = #tpu.dot_dimension_numbers<[1], [0], [0], [1], [0, 0, 1, 1], [], []>} : vector<18x32xf32>, vector<32x8xf32>, vector<18x8xf32> -> vector<18x8xf32>
    %35 = arith.addf %30, %34 : vector<18x8xf32>
    %cst_19 = arith.constant 0.000000e+00 : f32
    %36 = vector.broadcast %cst_19 : f32 to vector<18x8xf32>
    %37 = arith.maximumf %35, %36 : vector<18x8xf32>
    %c0_20 = arith.constant 0 : index
    %c0_21 = arith.constant 0 : index
    %c0_22 = arith.constant 0 : index
    %38 = vector.load %arg5[%c0_20, %c0_21, %c0_22] : memref<2x8x32xf32, #tpu.memory_space<vmem>>, vector<1x8x32xf32>
    %39 = vector.shape_cast %38 : vector<1x8x32xf32> to vector<8x32xf32>
    %cst_23 = arith.constant dense<0.000000e+00> : vector<18x32xf32>
    %40 = tpu.matmul %37, %39, %cst_23 {dimension_numbers = #tpu.dot_dimension_numbers<[1], [0], [0], [1], [0, 0, 1, 1], [], []>} : vector<18x8xf32>, vector<8x32xf32>, vector<18x32xf32> -> vector<18x32xf32>
    %41 = vector.extract_strided_slice %6 {offsets = [1, 0], sizes = [18, 32], strides = [1, 1]} : vector<20x32xf32> to vector<18x32xf32>
    %42 = arith.addf %41, %40 : vector<18x32xf32>
    %c1_i32 = arith.constant 1 : i32
    %43 = arith.subi %0, %c1_i32 : i32
    %44 = tpu.iota {dimensions = array<i32: 0>} : vector<18x1xi32>
    %45 = vector.broadcast %43 : i32 to vector<18x1xi32>
    %46 = arith.addi %44, %45 : vector<18x1xi32>
    %c0_i32_24 = arith.constant 0 : i32
    %47 = vector.broadcast %c0_i32_24 : i32 to vector<18x1xi32>
    %48 = arith.cmpi sge, %46, %47 : vector<18x1xi32>
    %c33_i32_25 = arith.constant 33 : i32
    %49 = vector.broadcast %c33_i32_25 : i32 to vector<18x1xi32>
    %50 = arith.cmpi slt, %46, %49 : vector<18x1xi32>
    %51 = arith.andi %48, %50 : vector<18x1xi1>
    %cst_26 = arith.constant 0.000000e+00 : f32
    %52 = vector.broadcast %cst_26 : f32 to vector<18x32xf32>
    %53 = arith.maximumf %42, %52 : vector<18x32xf32>
    %cst_27 = arith.constant 0.000000e+00 : f32
    %54 = vector.shape_cast %51 : vector<18x1xi1> to vector<18x1xi1>
    %55 = vector.broadcast %54 : vector<18x1xi1> to vector<18x32xi1>
    %56 = vector.broadcast %cst_27 : f32 to vector<18x32xf32>
    %57 = arith.select %55, %53, %56 : vector<18x32xi1>, vector<18x32xf32>
    %58 = vector.extract_strided_slice %57 {offsets = [0, 0], sizes = [16, 32], strides = [1, 1]} : vector<18x32xf32> to vector<16x32xf32>
    %c1_28 = arith.constant 1 : index
    %c0_29 = arith.constant 0 : index
    %c0_30 = arith.constant 0 : index
    %c0_31 = arith.constant 0 : index
    %59 = vector.load %arg4[%c1_28, %c0_29, %c0_30, %c0_31] : memref<2x3x32x8xf32, #tpu.memory_space<vmem>>, vector<1x1x32x8xf32>
    %60 = vector.shape_cast %59 : vector<1x1x32x8xf32> to vector<32x8xf32>
    %cst_32 = arith.constant dense<0.000000e+00> : vector<16x8xf32>
    %61 = tpu.matmul %58, %60, %cst_32 {dimension_numbers = #tpu.dot_dimension_numbers<[1], [0], [0], [1], [0, 0, 1, 1], [], []>} : vector<16x32xf32>, vector<32x8xf32>, vector<16x8xf32> -> vector<16x8xf32>
    %62 = vector.extract_strided_slice %57 {offsets = [1, 0], sizes = [16, 32], strides = [1, 1]} : vector<18x32xf32> to vector<16x32xf32>
    %c1_33 = arith.constant 1 : index
    %c1_34 = arith.constant 1 : index
    %c0_35 = arith.constant 0 : index
    %c0_36 = arith.constant 0 : index
    %63 = vector.load %arg4[%c1_33, %c1_34, %c0_35, %c0_36] : memref<2x3x32x8xf32, #tpu.memory_space<vmem>>, vector<1x1x32x8xf32>
    %64 = vector.shape_cast %63 : vector<1x1x32x8xf32> to vector<32x8xf32>
    %cst_37 = arith.constant dense<0.000000e+00> : vector<16x8xf32>
    %65 = tpu.matmul %62, %64, %cst_37 {dimension_numbers = #tpu.dot_dimension_numbers<[1], [0], [0], [1], [0, 0, 1, 1], [], []>} : vector<16x32xf32>, vector<32x8xf32>, vector<16x8xf32> -> vector<16x8xf32>
    %66 = arith.addf %61, %65 : vector<16x8xf32>
    %67 = vector.extract_strided_slice %57 {offsets = [2, 0], sizes = [16, 32], strides = [1, 1]} : vector<18x32xf32> to vector<16x32xf32>
    %c1_38 = arith.constant 1 : index
    %c2_39 = arith.constant 2 : index
    %c0_40 = arith.constant 0 : index
    %c0_41 = arith.constant 0 : index
    %68 = vector.load %arg4[%c1_38, %c2_39, %c0_40, %c0_41] : memref<2x3x32x8xf32, #tpu.memory_space<vmem>>, vector<1x1x32x8xf32>
    %69 = vector.shape_cast %68 : vector<1x1x32x8xf32> to vector<32x8xf32>
    %cst_42 = arith.constant dense<0.000000e+00> : vector<16x8xf32>
    %70 = tpu.matmul %67, %69, %cst_42 {dimension_numbers = #tpu.dot_dimension_numbers<[1], [0], [0], [1], [0, 0, 1, 1], [], []>} : vector<16x32xf32>, vector<32x8xf32>, vector<16x8xf32> -> vector<16x8xf32>
    %71 = arith.addf %66, %70 : vector<16x8xf32>
    %cst_43 = arith.constant 0.000000e+00 : f32
    %72 = vector.broadcast %cst_43 : f32 to vector<16x8xf32>
    %73 = arith.maximumf %71, %72 : vector<16x8xf32>
    %c1_44 = arith.constant 1 : index
    %c0_45 = arith.constant 0 : index
    %c0_46 = arith.constant 0 : index
    %74 = vector.load %arg5[%c1_44, %c0_45, %c0_46] : memref<2x8x32xf32, #tpu.memory_space<vmem>>, vector<1x8x32xf32>
    %75 = vector.shape_cast %74 : vector<1x8x32xf32> to vector<8x32xf32>
    %cst_47 = arith.constant dense<0.000000e+00> : vector<16x32xf32>
    %76 = tpu.matmul %73, %75, %cst_47 {dimension_numbers = #tpu.dot_dimension_numbers<[1], [0], [0], [1], [0, 0, 1, 1], [], []>} : vector<16x8xf32>, vector<8x32xf32>, vector<16x32xf32> -> vector<16x32xf32>
    %77 = vector.extract_strided_slice %42 {offsets = [1, 0], sizes = [16, 32], strides = [1, 1]} : vector<18x32xf32> to vector<16x32xf32>
    %78 = arith.addf %77, %76 : vector<16x32xf32>
    %cst_48 = arith.constant 0.000000e+00 : f32
    %79 = vector.broadcast %cst_48 : f32 to vector<16x32xf32>
    %80 = arith.maximumf %78, %79 : vector<16x32xf32>
    %81 = vector.extract_strided_slice %5 {offsets = [2, 0], sizes = [16, 32], strides = [1, 1]} : vector<24x32xf32> to vector<16x32xf32>
    %82 = arith.addf %80, %81 : vector<16x32xf32>
    %c0_49 = arith.constant 0 : index
    %c0_50 = arith.constant 0 : index
    %c0_51 = arith.constant 0 : index
    %83 = vector.load %arg6[%c0_49, %c0_50, %c0_51] : memref<1x16x32xf32, #tpu.memory_space<vmem>>, vector<1x16x32xf32>
    %84 = vector.shape_cast %83 : vector<1x16x32xf32> to vector<16x32xf32>
    %85 = vector.shape_cast %82 : vector<16x32xf32> to vector<1x16x32xf32>
    tpu.vector_store %arg6[%c0_49, %c0_50, %c0_51], %85 {strides = array<i32>} : memref<1x16x32xf32, #tpu.memory_space<vmem>>, vector<1x16x32xf32>,
    return
  }
  func.func @transform_0(%arg0: i32, %arg1: i32) -> (i32, i32, i32) {
    %c0_i32 = arith.constant 0 : i32
    %c0_i32_0 = arith.constant 0 : i32
    return %arg0, %arg1, %c0_i32 : i32, i32, i32
  }
  func.func @transform_1(%arg0: i32, %arg1: i32) -> (i32, i32, i32) {
    %c1_i32 = arith.constant 1 : i32
    %0 = arith.addi %arg1, %c1_i32 : i32
    %c2_i32 = arith.constant 2 : i32
    %1 = arith.muli %0, %c2_i32 : i32
    %c0_i32 = arith.constant 0 : i32
    %c0_i32_0 = arith.constant 0 : i32
    return %arg0, %1, %c0_i32 : i32, i32, i32
  }
  func.func @transform_2(%arg0: i32, %arg1: i32) -> (i32, i32, i32, i32) {
    %c0_i32 = arith.constant 0 : i32
    %c0_i32_0 = arith.constant 0 : i32
    %c0_i32_1 = arith.constant 0 : i32
    %c0_i32_2 = arith.constant 0 : i32
    %c0_i32_3 = arith.constant 0 : i32
    return %c0_i32, %c0_i32_0, %c0_i32_1, %c0_i32_2 : i32, i32, i32, i32
  }
  func.func @transform_3(%arg0: i32, %arg1: i32) -> (i32, i32, i32) {
    %c0_i32 = arith.constant 0 : i32
    %c0_i32_0 = arith.constant 0 : i32
    %c0_i32_1 = arith.constant 0 : i32
    %c0_i32_2 = arith.constant 0 : i32
    return %c0_i32, %c0_i32_0, %c0_i32_1 : i32, i32, i32
  }
  func.func @transform_4(%arg0: i32, %arg1: i32) -> (i32, i32, i32) {
    %c0_i32 = arith.constant 0 : i32
    %c0_i32_0 = arith.constant 0 : i32
    return %arg0, %arg1, %c0_i32 : i32, i32, i32
  }
}

</mosaic_0001>

<llo_original>
// kernel: convolutional_encoder_forward.3
$region0: #{convolutional_encoder_forward.3}
  #allocation0 [shape = 'u32[]', space=smem, size = 0x4, offset = 0x4, fixed_abs, tag = 'smem constant byte address 0x4 - core index']
  #allocation1 [shape = 'u32[72,128]{1,0:T(1,128)}', space=vmem, size = 0x9000, scoped, tag = 'internal scratch']
  %s0 = inlined_call_operand.vmem [shape: f32[2,72,4], index: 0, kind: input, shape index: {}, may-alias: {0,1}]
  %s1 = inlined_call_operand.vmem [shape: f32[2,72,4], index: 1, kind: input, shape index: {}, may-alias: {0,1}]
  %s2 = inlined_call_operand.vmem [shape: f32[3,4,32], index: 2, kind: input, shape index: {}]
  %s3 = inlined_call_operand.vmem [shape: f32[3,32,32], index: 3, kind: input, shape index: {}]
  %s4 = inlined_call_operand.vmem [shape: f32[2,1,32], index: 4, kind: input, shape index: {}]
  %s5 = inlined_call_operand.vmem [shape: f32[2,64,32], index: 5, kind: output, shape index: {}]
  %s6 = sld [smem:[#allocation0]]
  $region53: #{convolutional_encoder_forward.3} parent=0
    _
  %s8 = ssub.s32 1, %s6
  %s9 = scalar_select 0, %s8, %s6
  loop: start=0, step=1, limit=10
  $region2: #{convolutional_encoder_forward.3} parent=0 // loop_pre_header
    _
  $region3: #{convolutional_encoder_forward.3} parent=0 // loop_header
    %s11 = sphi 0, %s15
    %p12 = scmp.ge.s32.totalorder %s11, 10
    %s18 = sphi 0, %s30
    %s19 = sphi 0, %s26
    %s20 = sphi 0, %s18
    %s21 = sphi 0, %s19
    %s22 = sphi 0, %s20
    %s23 = sphi 0, %s21
    %s35 = sphi 0, %s37
    %s38 = sphi 0, %s35
    %s39 = sphi 0, %s38
    %s55 = sphi 0, %s39
    %s67 = sphi 0, %s69
    %s70 = sphi 0, %s67
    %s71 = sphi 0, %s70
    %s87 = sphi 0, %s71
    %s91 = sphi 0, %s91
    %s93 = sphi 0, %s91
    %s94 = sphi 0, %s93
    %s108 = sphi 0, %s94
    %s112 = sphi 0, %s112
    %s114 = sphi 0, %s112
    %s115 = sphi 0, %s114
    %s129 = sphi 0, %s115
    %s133 = sphi 0, %s133
    %s135 = sphi 0, %s133
    %s136 = sphi 0, %s135
    %s150 = sphi 0, %s136
    %s158 = sphi 0, %s160
    %s161 = sphi 0, %s158
    %s162 = sphi 0, %s161
    %s178 = sphi 0, %s162
  $region4: #{convolutional_encoder_forward.3} parent=0 // loop_header_branch
    %14 = sbr.rel (%p12) target = $region8
  $region5: #{convolutional_encoder_forward.3} parent=0 // loop_body
    %s16 = ssub.s32 %s11, 1
    %s17 = ssub.s32 %s11, 2
    %s24 = sadd.s32 1, %s19
    %p25 = scmp.ge.s32.totalorder %s24, 4
    %s26 = scalar_select %p25, 0, %s24
    %s27 = sadd.s32 1, %s18
    %s28 = scalar_select %p25, %s27, %s18
    %p29 = scmp.ge.s32.totalorder %s28, 2
    %s30 = scalar_select %p29, 0, %s28
    %s31 = ssub.s32 %s18, %s30
    %s32 = ssub.s32 %s19, %s26
    %s33 = sor.u32 %s31, %s32
    %p34 = scmp.eq.s32.totalorder %s33, 0
    %s36 = sadd.s32 %s35, 1
    %s37 = scalar_select %p34, %s35, %s36
    %p40 = pneg %p34
    %p41 = scmp.eq.s32.totalorder %s11, 7
    %p42 = por %p40, %p41
    %p43 = scmp.ne.s32.totalorder %s35, %s38
    %p44 = scmp.eq.s32.totalorder %s11, 0
    %p45 = por %p43, %p44
    %p46 = scmp.ne.s32.totalorder %s35, %s38
    %p47 = scmp.eq.s32.totalorder %s16, 7
    %p48 = por %p46, %p47
    %p49 = scmp.ne.s32.totalorder %s38, %s39
    %p50 = scmp.eq.s32.totalorder %s16, 0
    %p51 = por %p49, %p50
    %p52 = scmp.ne.s32.totalorder %s38, %s39
    %p53 = scmp.eq.s32.totalorder %s17, 7
    %p54 = por %p52, %p53
    %p56 = scmp.ne.s32.totalorder %s39, %s55
    %p57 = scmp.eq.s32.totalorder %s17, 0
    %p58 = por %p56, %p57
    %s59 = sadd.s32 %s19, 1
    %s60 = smul.u32 %s59, 2
    %s61 = sadd.s32 %s26, 1
    %s62 = smul.u32 %s61, 2
    %s63 = ssub.s32 %s18, %s30
    %s64 = ssub.s32 %s60, %s62
    %s65 = sor.u32 %s63, %s64
    %p66 = scmp.eq.s32.totalorder %s65, 0
    %s68 = sadd.s32 %s67, 1
    %s69 = scalar_select %p66, %s67, %s68
    %p72 = pneg %p66
    %p73 = scmp.eq.s32.totalorder %s11, 7
    %p74 = por %p72, %p73
    %p75 = scmp.ne.s32.totalorder %s67, %s70
    %p76 = scmp.eq.s32.totalorder %s11, 0
    %p77 = por %p75, %p76
    %p78 = scmp.ne.s32.totalorder %s67, %s70
    %p79 = scmp.eq.s32.totalorder %s16, 7
    %p80 = por %p78, %p79
    %p81 = scmp.ne.s32.totalorder %s70, %s71
    %p82 = scmp.eq.s32.totalorder %s16, 0
    %p83 = por %p81, %p82
    %p84 = scmp.ne.s32.totalorder %s70, %s71
    %p85 = scmp.eq.s32.totalorder %s17, 7
    %p86 = por %p84, %p85
    %p88 = scmp.ne.s32.totalorder %s71, %s87
    %p89 = scmp.eq.s32.totalorder %s17, 0
    %p90 = por %p88, %p89
    %s92 = sadd.s32 %s91, 1
    %p95 = scmp.eq.s32.totalorder %s11, 7
    %p96 = scmp.ne.s32.totalorder %s91, %s93
    %p97 = scmp.eq.s32.totalorder %s11, 0
    %p98 = por %p96, %p97
    %p99 = scmp.ne.s32.totalorder %s91, %s93
    %p100 = scmp.eq.s32.totalorder %s16, 7
    %p101 = por %p99, %p100
    %p102 = scmp.ne.s32.totalorder %s93, %s94
    %p103 = scmp.eq.s32.totalorder %s16, 0
    %p104 = por %p102, %p103
    %p105 = scmp.ne.s32.totalorder %s93, %s94
    %p106 = scmp.eq.s32.totalorder %s17, 7
    %p107 = por %p105, %p106
    %p109 = scmp.ne.s32.totalorder %s94, %s108
    %p110 = scmp.eq.s32.totalorder %s17, 0
    %p111 = por %p109, %p110
    %s113 = sadd.s32 %s112, 1
    %p116 = scmp.eq.s32.totalorder %s11, 7
    %p117 = scmp.ne.s32.totalorder %s112, %s114
    %p118 = scmp.eq.s32.totalorder %s11, 0
    %p119 = por %p117, %p118
    %p120 = scmp.ne.s32.totalorder %s112, %s114
    %p121 = scmp.eq.s32.totalorder %s16, 7
    %p122 = por %p120, %p121
    %p123 = scmp.ne.s32.totalorder %s114, %s115
    %p124 = scmp.eq.s32.totalorder %s16, 0
    %p125 = por %p123, %p124
    %p126 = scmp.ne.s32.totalorder %s114, %s115
    %p127 = scmp.eq.s32.totalorder %s17, 7
    %p128 = por %p126, %p127
    %p130 = scmp.ne.s32.totalorder %s115, %s129
    %p131 = scmp.eq.s32.totalorder %s17, 0
    %p132 = por %p130, %p131
    %s134 = sadd.s32 %s133, 1
    %p137 = scmp.eq.s32.totalorder %s11, 7
    %p138 = scmp.ne.s32.totalorder %s133, %s135
    %p139 = scmp.eq.s32.totalorder %s11, 0
    %p140 = por %p138, %p139
    %p141 = scmp.ne.s32.totalorder %s133, %s135
    %p142 = scmp.eq.s32.totalorder %s16, 7
    %p143 = por %p141, %p142
    %p144 = scmp.ne.s32.totalorder %s135, %s136
    %p145 = scmp.eq.s32.totalorder %s16, 0
    %p146 = por %p144, %p145
    %p147 = scmp.ne.s32.totalorder %s135, %s136
    %p148 = scmp.eq.s32.totalorder %s17, 7
    %p149 = por %p147, %p148
    %p151 = scmp.ne.s32.totalorder %s136, %s150
    %p152 = scmp.eq.s32.totalorder %s17, 0
    %p153 = por %p151, %p152
    %s154 = ssub.s32 %s18, %s30
    %s155 = ssub.s32 %s19, %s26
    %s156 = sor.u32 %s154, %s155
    %p157 = scmp.eq.s32.totalorder %s156, 0
    %s159 = sadd.s32 %s158, 1
    %s160 = scalar_select %p157, %s158, %s159
    %p163 = pneg %p157
    %p164 = scmp.eq.s32.totalorder %s11, 7
    %p165 = por %p163, %p164
    %p166 = scmp.ne.s32.totalorder %s158, %s161
    %p167 = scmp.eq.s32.totalorder %s11, 0
    %p168 = por %p166, %p167
    %p169 = scmp.ne.s32.totalorder %s158, %s161
    %p170 = scmp.eq.s32.totalorder %s16, 7
    %p171 = por %p169, %p170
    %p172 = scmp.ne.s32.totalorder %s161, %s162
    %p173 = scmp.eq.s32.totalorder %s16, 0
    %p174 = por %p172, %p173
    %p175 = scmp.ne.s32.totalorder %s161, %s162
    %p176 = scmp.eq.s32.totalorder %s17, 7
    %p177 = por %p175, %p176
    %p179 = scmp.ne.s32.totalorder %s162, %s178
    %p180 = scmp.eq.s32.totalorder %s17, 0
    %p181 = por %p179, %p180
    %p182 = scmp.le.s32.totalorder 1, %s11
    %p183 = scmp.lt.s32.totalorder %s11, 9
    %p184 = pnand %p182, %p183
    %p185 = pneg %p184
    // Predicated region
    $region9: #{convolutional_encoder_forward.3} parent=5 // pred_check
      _
    $region10: #{convolutional_encoder_forward.3} parent=5 // pred_check_branch
      %187 = sbr.rel (%p184) target = $region12
    $region11: #{convolutional_encoder_forward.3} parent=5 // pred_region
      %s188 = ssub.s32 %s11, 1
      // Predicated region
      $region13: #{convolutional_encoder_forward.3} parent=11 // pred_check
        %p189 = pneg %p104
      $region14: #{convolutional_encoder_forward.3} parent=11 // pred_check_branch
        %191 = sbr.rel (%p189) target = $region16
      $region15: #{convolutional_encoder_forward.3} parent=11 // pred_region
        _
      $region16: #{convolutional_encoder_forward.3} parent=11 // pred_fallthru
        _
      // Predicated region
      $region17: #{convolutional_encoder_forward.3} parent=11 // pred_check
        %p192 = pneg %p125
      $region18: #{convolutional_encoder_forward.3} parent=11 // pred_check_branch
        %194 = sbr.rel (%p192) target = $region20
      $region19: #{convolutional_encoder_forward.3} parent=11 // pred_region
        _
      $region20: #{convolutional_encoder_forward.3} parent=11 // pred_fallthru
        _
      // Predicated region
      $region21: #{convolutional_encoder_forward.3} parent=11 // pred_check
        %p195 = pneg %p146
      $region22: #{convolutional_encoder_forward.3} parent=11 // pred_check_branch
        %197 = sbr.rel (%p195) target = $region24
      $region23: #{convolutional_encoder_forward.3} parent=11 // pred_region
        _
      $region24: #{convolutional_encoder_forward.3} parent=11 // pred_fallthru
        _
    $region12: #{convolutional_encoder_forward.3} parent=5 // pred_fallthru
      _
    %p198 = scmp.lt.s32.totalorder %s11, 8
    // Predicated region
    $region25: #{convolutional_encoder_forward.3} parent=5 // pred_check
      %p199 = pneg %p198
    $region26: #{convolutional_encoder_forward.3} parent=5 // pred_check_branch
      %201 = sbr.rel (%p199) target = $region28
    $region27: #{convolutional_encoder_forward.3} parent=5 // pred_region
      // Predicated region
      $region29: #{convolutional_encoder_forward.3} parent=27 // pred_check
        %p202 = pneg %p45
      $region30: #{convolutional_encoder_forward.3} parent=27 // pred_check_branch
        %204 = sbr.rel (%p202) target = $region32
      $region31: #{convolutional_encoder_forward.3} parent=27 // pred_region
        %s205 = smul.u32 2, %s19
        %s206 = ssub.s32 9, %s205
        %p207 = scmp.lt.s32.totalorder %s206, 2
        %s208 = scalar_select %p207, %s206, 2
        %s209 = smul.u32 8, %s208
        %p210 = scmp.lt.s32.totalorder %s18, 1
        %s211 = scalar_select %p210, %s18, 1
        %p212 = scmp.lt.s32.totalorder %s205, 8
        %s213 = scalar_select %p212, %s205, 8
        %s214 = smul.addr %s211, 9
        %s215 = sadd.s32 %s213, %s214
        %s216 = smul.addr %s215, 8
        %s217 = scalar_lea.vmem %s0, %s216
        %s218 = smul.u32 2, %s19
        %s219 = ssub.s32 9, %s218
        %p220 = scmp.lt.s32.totalorder %s219, 2
        %s221 = scalar_select %p220, %s219, 2
        %s222 = smul.u32 8, %s221
      $region32: #{convolutional_encoder_forward.3} parent=27 // pred_fallthru
        _
      // Predicated region
      $region33: #{convolutional_encoder_forward.3} parent=27 // pred_check
        %p223 = pneg %p77
      $region34: #{convolutional_encoder_forward.3} parent=27 // pred_check_branch
        %225 = sbr.rel (%p223) target = $region36
      $region35: #{convolutional_encoder_forward.3} parent=27 // pred_region
        %s226 = sadd.s32 %s19, 1
        %s227 = smul.u32 %s226, 2
        %p228 = scmp.lt.s32.totalorder %s18, 1
        %s229 = scalar_select %p228, %s18, 1
        %p230 = scmp.lt.s32.totalorder %s227, 8
        %s231 = scalar_select %p230, %s227, 8
        %s232 = smul.addr %s229, 9
        %s233 = sadd.s32 %s231, %s232
        %s234 = smul.addr %s233, 8
        %s235 = scalar_lea.vmem %s1, %s234
        %s236 = sadd.s32 %s19, 1
        %s237 = smul.u32 %s236, 2
      $region36: #{convolutional_encoder_forward.3} parent=27 // pred_fallthru
        _
    $region28: #{convolutional_encoder_forward.3} parent=5 // pred_fallthru
      _
    %p238 = scmp.le.s32.totalorder 1, %s11
    %p239 = scmp.lt.s32.totalorder %s11, 9
    %p240 = pnand %p238, %p239
    %p241 = pneg %p240
    // Predicated region
    $region37: #{convolutional_encoder_forward.3} parent=5 // pred_check
      _
    $region38: #{convolutional_encoder_forward.3} parent=5 // pred_check_branch
      %243 = sbr.rel (%p240) target = $region40
    $region39: #{convolutional_encoder_forward.3} parent=5 // pred_region
      %s244 = ssub.s32 %s11, 1
      %s245 = smul.u32 2, %s21
      %s246 = ssub.s32 9, %s245
      %p247 = scmp.lt.s32.totalorder %s246, 2
      %s248 = scalar_select %p247, %s246, 2
      %s249 = smul.u32 8, %s248
      %p250 = scmp.lt.s32.totalorder %s20, 1
      %s251 = scalar_select %p250, %s20, 1
      %p252 = scmp.lt.s32.totalorder %s245, 8
      %s253 = scalar_select %p252, %s245, 8
      %s254 = smul.addr %s251, 9
      %s255 = sadd.s32 %s253, %s254
      %s256 = smul.addr %s255, 8
      %s257 = scalar_lea.vmem %s0, %s256
      %p258 = pneg %p51
      %p259 = pneg %p48
      %s260 = sadd.s32 %s21, 1
      %s261 = smul.u32 %s260, 2
      %p262 = scmp.lt.s32.totalorder %s20, 1
      %s263 = scalar_select %p262, %s20, 1
      %p264 = scmp.lt.s32.totalorder %s261, 8
      %s265 = scalar_select %p264, %s261, 8
      %s266 = smul.addr %s263, 9
      %s267 = sadd.s32 %s265, %s266
      %s268 = smul.addr %s267, 8
      %s269 = scalar_lea.vmem %s1, %s268
      %p270 = pneg %p83
      %p271 = pneg %p80
      %p272 = pneg %p104
      %p273 = pneg %p101
      %p274 = pneg %p125
      %p275 = pneg %p122
      %p276 = pneg %p146
      %p277 = pneg %p143
      %p278 = pneg %p174
      %p279 = pneg %p171
      %s280 = smul.u32 2, %s21
      %p281 = scmp.lt.s32.totalorder %s20, 1
      %s282 = scalar_select %p281, %s20, 1
      %p283 = scmp.lt.s32.totalorder %s280, 7
      %s284 = scalar_select %p283, %s280, 7
      %s285 = smul.addr %s282, 8
      %s286 = sadd.s32 %s284, %s285
      %s287 = smul.addr %s286, 8
      %s288 = scalar_lea.vmem %s5, %s287
      %s289 = smul.u32 2, %s21
      %s290 = ssub.s32 9, %s289
      %p291 = scmp.lt.s32.totalorder %s290, 2
      %s292 = scalar_select %p291, %s290, 2
      %s293 = smul.u32 8, %s292
      %p294 = scmp.lt.s32.totalorder %s20, 1
      %s295 = scalar_select %p294, %s20, 1
      %p296 = scmp.lt.s32.totalorder %s289, 8
      %s297 = scalar_select %p296, %s289, 8
      %s298 = smul.addr %s295, 9
      %s299 = sadd.s32 %s297, %s298
      %s300 = smul.addr %s299, 8
      %s301 = scalar_lea.vmem %s0, %s300
      %s302 = smul.u32 2, %s21
      %s303 = ssub.s32 9, %s302
      %p304 = scmp.lt.s32.totalorder %s303, 2
      %s305 = scalar_select %p304, %s303, 2
      %s306 = smul.u32 8, %s305
      %s307 = sadd.s32 %s21, 1
      %s308 = smul.u32 %s307, 2
      %p309 = scmp.lt.s32.totalorder %s20, 1
      %s310 = scalar_select %p309, %s20, 1
      %p311 = scmp.lt.s32.totalorder %s308, 8
      %s312 = scalar_select %p311, %s308, 8
      %s313 = smul.addr %s310, 9
      %s314 = sadd.s32 %s312, %s313
      %s315 = smul.addr %s314, 8
      %s316 = scalar_lea.vmem %s1, %s315
      %s317 = sadd.s32 %s21, 1
      %s318 = smul.u32 %s317, 2
      %s319 = smul.u32 2, %s21
      %p320 = scmp.lt.s32.totalorder %s20, 1
      %s321 = scalar_select %p320, %s20, 1
      %p322 = scmp.lt.s32.totalorder %s319, 7
      %s323 = scalar_select %p322, %s319, 7
      %s324 = smul.addr %s321, 8
      %s325 = sadd.s32 %s323, %s324
      %s326 = smul.addr %s325, 8
      %s327 = scalar_lea.vmem %s5, %s326
      %s328 = smul.u32 2, %s21
      %s329 = smul.u32 %s21, 16
      %v330 = vld [vmem:[%s301] sm:$0xff]
      %v331 = vld [vmem:[%s301 + $0x8] sm:$0xff]
      %v332 = vld [vmem:[%s316] sm:$0xff]
      %v333 = vld [vmem:[%s2] sm:$0xf]
      %s334 = scalar_lea.vmem %s2, 4
      %v335 = vld [vmem:[%s334] sm:$0xf]
      %vm339 = vcmask 1046528
      %v340 = vrot.slane %v330, 1
      %v341 = vrot.slane %v331, 1
      %v342 = vsel %vm339, %v340, %v341
      %v343 = vrot.slane %v332, 1
      %v344 = vsel %vm339, %v341, %v343
      %vm345 = vcmask 31744
      %v346 = vsel %vm345, %v342, 0
      %v348 = vsel %vm345, %v344, 0
      %v350 = vsel %vm345, %v343, 0
      %vm352 = vcmask 1043456
      %v354 = vsel %vm352, %v335, 0
      %356 = vmatpush.msra.mxu0 0.0
      %357 = vmatpush.msra.mxu0 0.0
      %358 = vmatpush.msra.mxu0 0.0
      %359 = vmatpush.msra.mxu0 0.0
      %360 = vmatpush.msra.mxu0 0.0
      %361 = vmatpush.msra.mxu0 0.0
      %362 = vmatpush.msra.mxu0 0.0
      %363 = vmatpush.msra.mxu0 0.0
      %364 = vmatpush.msra.mxu0 0.0
      %365 = vmatpush.msra.mxu0 0.0
      %366 = vmatpush.msra.mxu0 0.0
      %367 = vmatpush.msra.mxu0 0.0
      %368 = vmatpush.msra.mxu0 0.0
      %369 = vmatpush.msra.mxu0 0.0
      %370 = vmatpush.msra.mxu0 0.0
      %371 = vmatpush.msra.mxu0 %v354
      %372 = vmatmul.f32.gmra.mxu0 %v346
      %v373 = vpop.f32.mrf.mxu0
      %v374 = vadd.f32 0.0, %v373
      %375 = vmatmul.f32.gmra.mxu0 %v348
      %v376 = vpop.f32.mrf.mxu0
      %v377 = vadd.f32 0.0, %v376
      %378 = vmatmul.f32.gmra.mxu0 %v350
      %v379 = vpop.f32.mrf.mxu0
      %v380 = vadd.f32 0.0, %v379
      %381 = vdwg.mxu0
      %v382 = vsel %vm345, %v330, 0
      %v384 = vsel %vm345, %v331, 0
      %v386 = vsel %vm345, %v332, 0
      %v389 = vsel %vm352, %v333, 0
      %391 = vmatpush.msra.mxu0 0.0
      %392 = vmatpush.msra.mxu0 0.0
      %393 = vmatpush.msra.mxu0 0.0
      %394 = vmatpush.msra.mxu0 0.0
      %395 = vmatpush.msra.mxu0 0.0
      %396 = vmatpush.msra.mxu0 0.0
      %397 = vmatpush.msra.mxu0 0.0
      %398 = vmatpush.msra.mxu0 0.0
      %399 = vmatpush.msra.mxu0 0.0
      %400 = vmatpush.msra.mxu0 0.0
      %401 = vmatpush.msra.mxu0 0.0
      %402 = vmatpush.msra.mxu0 0.0
      %403 = vmatpush.msra.mxu0 0.0
      %404 = vmatpush.msra.mxu0 0.0
      %405 = vmatpush.msra.mxu0 0.0
      %406 = vmatpush.msra.mxu0 %v389
      %407 = vmatmul.f32.gmra.mxu0 %v382
      %v408 = vpop.f32.mrf.mxu0
      %v409 = vadd.f32 %v374, %v408
      %410 = vmatmul.f32.gmra.mxu0 %v384
      %v411 = vpop.f32.mrf.mxu0
      %v412 = vadd.f32 %v377, %v411
      %413 = vmatmul.f32.gmra.mxu0 %v386
      %v414 = vpop.f32.mrf.mxu0
      %v415 = vadd.f32 %v380, %v414
      %416 = vdwg.mxu0
      %s417 = scalar_lea.vmem %s2, 8
      %v418 = vld [vmem:[%s417] sm:$0xf]
      %vm419 = vcmask 1045504
      %v420 = vrot.slane %v330, 2
      %v421 = vrot.slane %v331, 2
      %v422 = vsel %vm419, %v420, %v421
      %v423 = vrot.slane %v332, 2
      %v424 = vsel %vm419, %v421, %v423
      %v425 = vsel %vm345, %v422, 0
      %v427 = vsel %vm345, %v424, 0
      %v429 = vsel %vm345, %v423, 0
      %v432 = vsel %vm352, %v418, 0
      %434 = vmatpush.msra.mxu0 0.0
      %435 = vmatpush.msra.mxu0 0.0
      %436 = vmatpush.msra.mxu0 0.0
      %437 = vmatpush.msra.mxu0 0.0
      %438 = vmatpush.msra.mxu0 0.0
      %439 = vmatpush.msra.mxu0 0.0
      %440 = vmatpush.msra.mxu0 0.0
      %441 = vmatpush.msra.mxu0 0.0
      %442 = vmatpush.msra.mxu0 0.0
      %443 = vmatpush.msra.mxu0 0.0
      %444 = vmatpush.msra.mxu0 0.0
      %445 = vmatpush.msra.mxu0 0.0
      %446 = vmatpush.msra.mxu0 0.0
      %447 = vmatpush.msra.mxu0 0.0
      %448 = vmatpush.msra.mxu0 0.0
      %449 = vmatpush.msra.mxu0 %v432
      %450 = vmatmul.f32.gmra.mxu0 %v425
      %v451 = vpop.f32.mrf.mxu0
      %v452 = vadd.f32 0.0, %v451
      %453 = vmatmul.f32.gmra.mxu0 %v427
      %v454 = vpop.f32.mrf.mxu0
      %v455 = vadd.f32 0.0, %v454
      %456 = vmatmul.f32.gmra.mxu0 %v429
      %v457 = vpop.f32.mrf.mxu0
      %v458 = vadd.f32 0.0, %v457
      %459 = vdwg.mxu0
      %v460 = vadd.f32 %v409, %v452
      %v461 = vadd.f32 %v412, %v455
      %v462 = vadd.f32 %v415, %v458
      %v463 = vld [vmem:[%s4] sm:$0x1]
      %v465 = vperm.slane %v463, 0
      %v467 = vadd.f32 %v460, %v465
      %v468 = vadd.f32 %v461, %v465
      %v469 = vadd.f32 %v462, %v465
      %v470 = vmax.f32 %v467, 0.0
      %v471 = vmax.f32 %v468, 0.0
      %v472 = vmax.f32 %v469, 0.0
      %s473 = ssub.s32 %s329, 1
      %v474 = vlaneseq
      %v475 = vshrl.u32 %v474, 7
      %v476 = vadd.s32 %v475, 8
      %v477 = vadd.s32 %v475, 16
      %v478 = vstv %s473
      %v479 = vadd.s32 %v475, %v478
      %v480 = vadd.s32 %v476, %v478
      %v481 = vadd.s32 %v477, %v478
      %vm482 = vcmp.ge.s32.totalorder %v479, 0
      %vm483 = vcmp.ge.s32.totalorder %v480, 0
      %vm484 = vcmp.ge.s32.totalorder %v481, 0
      %vm485 = vcmp.lt.s32.totalorder %v479, 64
      %vm486 = vcmp.lt.s32.totalorder %v480, 64
      %vm487 = vcmp.lt.s32.totalorder %v481, 64
      %vm488 = vmand %vm482, %vm485
      %vm489 = vmand %vm483, %vm486
      %vm490 = vmand %vm484, %vm487
      %v491 = vsel %vm488, 1, 0
      %v492 = vsel %vm489, 1, 0
      %v493 = vsel %vm490, 1, 0
      %vm494 = vcmp.eq.s32.totalorder %v491, 1
      %vm495 = vcmp.eq.s32.totalorder %v492, 1
      %vm496 = vcmp.eq.s32.totalorder %v493, 1
      %v497 = vsel %vm494, %v470, 0.0
      %v498 = vsel %vm495, %v471, 0.0
      %v499 = vsel %vm496, %v472, 0.0
      %v500 = vld [vmem:[%s3] sm:$0xff]
      %v501 = vld [vmem:[%s3 + $0x8] sm:$0xff]
      %v502 = vld [vmem:[%s3 + $0x10] sm:$0xff]
      %v503 = vld [vmem:[%s3 + $0x18] sm:$0xff]
      %s504 = scalar_lea.vmem %s3, 32
      %v505 = vld [vmem:[%s504] sm:$0xff]
      %v506 = vld [vmem:[%s504 + $0x8] sm:$0xff]
      %v507 = vld [vmem:[%s504 + $0x10] sm:$0xff]
      %v508 = vld [vmem:[%s504 + $0x18] sm:$0xff]
      %v512 = vrot.slane %v497, 1
      %v513 = vrot.slane %v498, 1
      %v514 = vsel %vm339, %v512, %v513
      %v515 = vrot.slane %v499, 1
      %v516 = vsel %vm339, %v513, %v515
      %vm517 = vcmask 261120
      %v518 = vsel %vm517, %v514, 0
      %v520 = vsel %vm517, %v516, 0
      %522 = vmatpush.msra.mxu0 0.0
      %523 = vmatpush.msra.mxu0 0.0
      %524 = vmatpush.msra.mxu0 0.0
      %525 = vmatpush.msra.mxu0 0.0
      %526 = vmatpush.msra.mxu0 0.0
      %527 = vmatpush.msra.mxu0 0.0
      %528 = vmatpush.msra.mxu0 0.0
      %529 = vmatpush.msra.mxu0 0.0
      %530 = vmatpush.msra.mxu0 0.0
      %531 = vmatpush.msra.mxu0 0.0
      %532 = vmatpush.msra.mxu0 0.0
      %533 = vmatpush.msra.mxu0 0.0
      %534 = vmatpush.msra.mxu0 %v508
      %535 = vmatpush.msra.mxu0 %v507
      %536 = vmatpush.msra.mxu0 %v506
      %537 = vmatpush.msra.mxu0 %v505
      %538 = vmatmul.f32.gmra.mxu0 %v518
      %v539 = vpop.f32.mrf.mxu0
      %v540 = vadd.f32 0.0, %v539
      %541 = vmatmul.f32.gmra.mxu0 %v520
      %v542 = vpop.f32.mrf.mxu0
      %v543 = vadd.f32 0.0, %v542
      %544 = vdwg.mxu0
      %v545 = vsel %vm517, %v497, 0
      %v547 = vsel %vm517, %v498, 0
      %549 = vmatpush.msra.mxu0 0.0
      %550 = vmatpush.msra.mxu0 0.0
      %551 = vmatpush.msra.mxu0 0.0
      %552 = vmatpush.msra.mxu0 0.0
      %553 = vmatpush.msra.mxu0 0.0
      %554 = vmatpush.msra.mxu0 0.0
      %555 = vmatpush.msra.mxu0 0.0
      %556 = vmatpush.msra.mxu0 0.0
      %557 = vmatpush.msra.mxu0 0.0
      %558 = vmatpush.msra.mxu0 0.0
      %559 = vmatpush.msra.mxu0 0.0
      %560 = vmatpush.msra.mxu0 0.0
      %561 = vmatpush.msra.mxu0 %v503
      %562 = vmatpush.msra.mxu0 %v502
      %563 = vmatpush.msra.mxu0 %v501
      %564 = vmatpush.msra.mxu0 %v500
      %565 = vmatmul.f32.gmra.mxu0 %v545
      %v566 = vpop.f32.mrf.mxu0
      %v567 = vadd.f32 %v540, %v566
      %568 = vmatmul.f32.gmra.mxu0 %v547
      %v569 = vpop.f32.mrf.mxu0
      %v570 = vadd.f32 %v543, %v569
      %571 = vdwg.mxu0
      %s572 = scalar_lea.vmem %s3, 64
      %v573 = vld [vmem:[%s572] sm:$0xff]
      %v574 = vld [vmem:[%s572 + $0x8] sm:$0xff]
      %v575 = vld [vmem:[%s572 + $0x10] sm:$0xff]
      %v576 = vld [vmem:[%s572 + $0x18] sm:$0xff]
      %v577 = vrot.slane %v497, 2
      %v578 = vrot.slane %v498, 2
      %v579 = vsel %vm419, %v577, %v578
      %v580 = vrot.slane %v499, 2
      %v581 = vsel %vm419, %v578, %v580
      %v582 = vsel %vm517, %v579, 0
      %v584 = vsel %vm517, %v581, 0
      %586 = vmatpush.msra.mxu0 0.0
      %587 = vmatpush.msra.mxu0 0.0
      %588 = vmatpush.msra.mxu0 0.0
      %589 = vmatpush.msra.mxu0 0.0
      %590 = vmatpush.msra.mxu0 0.0
      %591 = vmatpush.msra.mxu0 0.0
      %592 = vmatpush.msra.mxu0 0.0
      %593 = vmatpush.msra.mxu0 0.0
      %594 = vmatpush.msra.mxu0 0.0
      %595 = vmatpush.msra.mxu0 0.0
      %596 = vmatpush.msra.mxu0 0.0
      %597 = vmatpush.msra.mxu0 0.0
      %598 = vmatpush.msra.mxu0 %v576
      %599 = vmatpush.msra.mxu0 %v575
      %600 = vmatpush.msra.mxu0 %v574
      %601 = vmatpush.msra.mxu0 %v573
      %602 = vmatmul.f32.gmra.mxu0 %v582
      %v603 = vpop.f32.mrf.mxu0
      %v604 = vadd.f32 0.0, %v603
      %605 = vmatmul.f32.gmra.mxu0 %v584
      %v606 = vpop.f32.mrf.mxu0
      %v607 = vadd.f32 0.0, %v606
      %608 = vdwg.mxu0
      %v609 = vadd.f32 %v567, %v604
      %v610 = vadd.f32 %v570, %v607
      %s611 = scalar_lea.vmem %s4, 1
      %v612 = vld [vmem:[%s611] sm:$0x1]
      %v614 = vperm.slane %v612, 0
      %v616 = vadd.f32 %v609, %v614
      %v617 = vadd.f32 %v610, %v614
      %v618 = vmax.f32 %v616, 0.0
      %v619 = vmax.f32 %v617, 0.0
      %v622 = vadd.f32 %v618, %v514
      %v623 = vadd.f32 %v619, %v516
      %624 = vst.msk [vmem:[%s327] sm:$0xff] %vm517, %v622
      %625 = vst.msk [vmem:[%s327 + $0x8] sm:$0xff] %vm517, %v623
      %s626 = smul.u32 2, %s21
      %p627 = scmp.lt.s32.totalorder %s20, 1
      %s628 = scalar_select %p627, %s20, 1
      %p629 = scmp.lt.s32.totalorder %s626, 7
      %s630 = scalar_select %p629, %s626, 7
      %s631 = smul.addr %s628, 8
      %s632 = sadd.s32 %s630, %s631
      %s633 = smul.addr %s632, 8
      %s634 = scalar_lea.vmem %s5, %s633
      // Predicated region
      $region41: #{convolutional_encoder_forward.3} parent=39 // pred_check
        %p635 = pneg %p171
      $region42: #{convolutional_encoder_forward.3} parent=39 // pred_check_branch
        %637 = sbr.rel (%p635) target = $region44
      $region43: #{convolutional_encoder_forward.3} parent=39 // pred_region
        %s638 = smul.u32 2, %s21
      $region44: #{convolutional_encoder_forward.3} parent=39 // pred_fallthru
        _
    $region40: #{convolutional_encoder_forward.3} parent=5 // pred_fallthru
      _
    %p639 = scmp.le.s32.totalorder 2, %s11
    // Predicated region
    $region45: #{convolutional_encoder_forward.3} parent=5 // pred_check
      %p640 = pneg %p639
    $region46: #{convolutional_encoder_forward.3} parent=5 // pred_check_branch
      %642 = sbr.rel (%p640) target = $region48
    $region47: #{convolutional_encoder_forward.3} parent=5 // pred_region
      %s643 = ssub.s32 %s11, 2
      // Predicated region
      $region49: #{convolutional_encoder_forward.3} parent=47 // pred_check
        %p644 = pneg %p177
      $region50: #{convolutional_encoder_forward.3} parent=47 // pred_check_branch
        %646 = sbr.rel (%p644) target = $region52
      $region51: #{convolutional_encoder_forward.3} parent=47 // pred_region
        %s647 = smul.u32 2, %s23
        %p648 = scmp.lt.s32.totalorder %s22, 1
        %s649 = scalar_select %p648, %s22, 1
        %p650 = scmp.lt.s32.totalorder %s647, 7
        %s651 = scalar_select %p650, %s647, 7
        %s652 = smul.addr %s649, 8
        %s653 = sadd.s32 %s651, %s652
        %s654 = smul.addr %s653, 8
        %s655 = scalar_lea.vmem %s5, %s654
      $region52: #{convolutional_encoder_forward.3} parent=47 // pred_fallthru
        _
    $region48: #{convolutional_encoder_forward.3} parent=5 // pred_fallthru
      _
  $region6: #{convolutional_encoder_forward.3} parent=0 // loop_footer
    %s15 = sadd.s32 1, %s11
  $region7: #{convolutional_encoder_forward.3} parent=0 // loop_footer_branch
    %10 = sbr.rel target = $region3
  $region8: #{convolutional_encoder_forward.3} parent=0 // loop_exit
    _

// kernel: convolutional_encoder_forward.4
$region0: #{convolutional_encoder_forward.4}
  #allocation0 [shape = 'u32[]', space=smem, size = 0x4, offset = 0x4, fixed_abs, tag = 'smem constant byte address 0x4 - core index']
  #allocation1 [shape = 'u32[72,128]{1,0:T(1,128)}', space=vmem, size = 0x9000, scoped, tag = 'internal scratch']
  %s0 = inlined_call_operand.vmem [shape: f32[2,56,64], index: 0, kind: input, shape index: {}, may-alias: {0,1}]
  %s1 = inlined_call_operand.vmem [shape: f32[2,56,64], index: 1, kind: input, shape index: {}, may-alias: {0,1}]
  %s2 = inlined_call_operand.vmem [shape: f32[2,64,32], index: 2, kind: input, shape index: {}]
  %s3 = inlined_call_operand.vmem [shape: f32[3,32,32], index: 3, kind: input, shape index: {}]
  %s4 = inlined_call_operand.vmem [shape: f32[3,32,32], index: 4, kind: input, shape index: {}]
  %s5 = inlined_call_operand.vmem [shape: f32[3,1,32], index: 5, kind: input, shape index: {}]
  %s6 = inlined_call_operand.vmem [shape: f32[2,48,32], index: 6, kind: output, shape index: {}]
  %s7 = sld [smem:[#allocation0]]
  $region57: #{convolutional_encoder_forward.4} parent=0
    _
  %s9 = ssub.s32 1, %s7
  %s10 = scalar_select 0, %s9, %s7
  loop: start=0, step=1, limit=8
  $region2: #{convolutional_encoder_forward.4} parent=0 // loop_pre_header
    _
  $region3: #{convolutional_encoder_forward.4} parent=0 // loop_header
    %s12 = sphi 0, %s16
    %p13 = scmp.ge.s32.totalorder %s12, 8
    %s19 = sphi 0, %s31
    %s20 = sphi 0, %s27
    %s21 = sphi 0, %s19
    %s22 = sphi 0, %s20
    %s23 = sphi 0, %s21
    %s24 = sphi 0, %s22
    %s36 = sphi 0, %s38
    %s39 = sphi 0, %s36
    %s40 = sphi 0, %s39
    %s56 = sphi 0, %s40
    %s68 = sphi 0, %s70
    %s71 = sphi 0, %s68
    %s72 = sphi 0, %s71
    %s88 = sphi 0, %s72
    %s92 = sphi 0, %s92
    %s94 = sphi 0, %s92
    %s95 = sphi 0, %s94
    %s109 = sphi 0, %s95
    %s113 = sphi 0, %s113
    %s115 = sphi 0, %s113
    %s116 = sphi 0, %s115
    %s130 = sphi 0, %s116
    %s134 = sphi 0, %s134
    %s136 = sphi 0, %s134
    %s137 = sphi 0, %s136
    %s151 = sphi 0, %s137
    %s155 = sphi 0, %s155
    %s157 = sphi 0, %s155
    %s158 = sphi 0, %s157
    %s172 = sphi 0, %s158
    %s180 = sphi 0, %s182
    %s183 = sphi 0, %s180
    %s184 = sphi 0, %s183
    %s200 = sphi 0, %s184
  $region4: #{convolutional_encoder_forward.4} parent=0 // loop_header_branch
    %15 = sbr.rel (%p13) target = $region8
  $region5: #{convolutional_encoder_forward.4} parent=0 // loop_body
    %s17 = ssub.s32 %s12, 1
    %s18 = ssub.s32 %s12, 2
    %s25 = sadd.s32 1, %s20
    %p26 = scmp.ge.s32.totalorder %s25, 3
    %s27 = scalar_select %p26, 0, %s25
    %s28 = sadd.s32 1, %s19
    %s29 = scalar_select %p26, %s28, %s19
    %p30 = scmp.ge.s32.totalorder %s29, 2
    %s31 = scalar_select %p30, 0, %s29
    %s32 = ssub.s32 %s19, %s31
    %s33 = ssub.s32 %s20, %s27
    %s34 = sor.u32 %s32, %s33
    %p35 = scmp.eq.s32.totalorder %s34, 0
    %s37 = sadd.s32 %s36, 1
    %s38 = scalar_select %p35, %s36, %s37
    %p41 = pneg %p35
    %p42 = scmp.eq.s32.totalorder %s12, 5
    %p43 = por %p41, %p42
    %p44 = scmp.ne.s32.totalorder %s36, %s39
    %p45 = scmp.eq.s32.totalorder %s12, 0
    %p46 = por %p44, %p45
    %p47 = scmp.ne.s32.totalorder %s36, %s39
    %p48 = scmp.eq.s32.totalorder %s17, 5
    %p49 = por %p47, %p48
    %p50 = scmp.ne.s32.totalorder %s39, %s40
    %p51 = scmp.eq.s32.totalorder %s17, 0
    %p52 = por %p50, %p51
    %p53 = scmp.ne.s32.totalorder %s39, %s40
    %p54 = scmp.eq.s32.totalorder %s18, 5
    %p55 = por %p53, %p54
    %p57 = scmp.ne.s32.totalorder %s40, %s56
    %p58 = scmp.eq.s32.totalorder %s18, 0
    %p59 = por %p57, %p58
    %s60 = sadd.s32 %s20, 1
    %s61 = smul.u32 %s60, 2
    %s62 = sadd.s32 %s27, 1
    %s63 = smul.u32 %s62, 2
    %s64 = ssub.s32 %s19, %s31
    %s65 = ssub.s32 %s61, %s63
    %s66 = sor.u32 %s64, %s65
    %p67 = scmp.eq.s32.totalorder %s66, 0
    %s69 = sadd.s32 %s68, 1
    %s70 = scalar_select %p67, %s68, %s69
    %p73 = pneg %p67
    %p74 = scmp.eq.s32.totalorder %s12, 5
    %p75 = por %p73, %p74
    %p76 = scmp.ne.s32.totalorder %s68, %s71
    %p77 = scmp.eq.s32.totalorder %s12, 0
    %p78 = por %p76, %p77
    %p79 = scmp.ne.s32.totalorder %s68, %s71
    %p80 = scmp.eq.s32.totalorder %s17, 5
    %p81 = por %p79, %p80
    %p82 = scmp.ne.s32.totalorder %s71, %s72
    %p83 = scmp.eq.s32.totalorder %s17, 0
    %p84 = por %p82, %p83
    %p85 = scmp.ne.s32.totalorder %s71, %s72
    %p86 = scmp.eq.s32.totalorder %s18, 5
    %p87 = por %p85, %p86
    %p89 = scmp.ne.s32.totalorder %s72, %s88
    %p90 = scmp.eq.s32.totalorder %s18, 0
    %p91 = por %p89, %p90
    %s93 = sadd.s32 %s92, 1
    %p96 = scmp.eq.s32.totalorder %s12, 5
    %p97 = scmp.ne.s32.totalorder %s92, %s94
    %p98 = scmp.eq.s32.totalorder %s12, 0
    %p99 = por %p97, %p98
    %p100 = scmp.ne.s32.totalorder %s92, %s94
    %p101 = scmp.eq.s32.totalorder %s17, 5
    %p102 = por %p100, %p101
    %p103 = scmp.ne.s32.totalorder %s94, %s95
    %p104 = scmp.eq.s32.totalorder %s17, 0
    %p105 = por %p103, %p104
    %p106 = scmp.ne.s32.totalorder %s94, %s95
    %p107 = scmp.eq.s32.totalorder %s18, 5
    %p108 = por %p106, %p107
    %p110 = scmp.ne.s32.totalorder %s95, %s109
    %p111 = scmp.eq.s32.totalorder %s18, 0
    %p112 = por %p110, %p111
    %s114 = sadd.s32 %s113, 1
    %p117 = scmp.eq.s32.totalorder %s12, 5
    %p118 = scmp.ne.s32.totalorder %s113, %s115
    %p119 = scmp.eq.s32.totalorder %s12, 0
    %p120 = por %p118, %p119
    %p121 = scmp.ne.s32.totalorder %s113, %s115
    %p122 = scmp.eq.s32.totalorder %s17, 5
    %p123 = por %p121, %p122
    %p124 = scmp.ne.s32.totalorder %s115, %s116
    %p125 = scmp.eq.s32.totalorder %s17, 0
    %p126 = por %p124, %p125
    %p127 = scmp.ne.s32.totalorder %s115, %s116
    %p128 = scmp.eq.s32.totalorder %s18, 5
    %p129 = por %p127, %p128
    %p131 = scmp.ne.s32.totalorder %s116, %s130
    %p132 = scmp.eq.s32.totalorder %s18, 0
    %p133 = por %p131, %p132
    %s135 = sadd.s32 %s134, 1
    %p138 = scmp.eq.s32.totalorder %s12, 5
    %p139 = scmp.ne.s32.totalorder %s134, %s136
    %p140 = scmp.eq.s32.totalorder %s12, 0
    %p141 = por %p139, %p140
    %p142 = scmp.ne.s32.totalorder %s134, %s136
    %p143 = scmp.eq.s32.totalorder %s17, 5
    %p144 = por %p142, %p143
    %p145 = scmp.ne.s32.totalorder %s136, %s137
    %p146 = scmp.eq.s32.totalorder %s17, 0
    %p147 = por %p145, %p146
    %p148 = scmp.ne.s32.totalorder %s136, %s137
    %p149 = scmp.eq.s32.totalorder %s18, 5
    %p150 = por %p148, %p149
    %p152 = scmp.ne.s32.totalorder %s137, %s151
    %p153 = scmp.eq.s32.totalorder %s18, 0
    %p154 = por %p152, %p153
    %s156 = sadd.s32 %s155, 1
    %p159 = scmp.eq.s32.totalorder %s12, 5
    %p160 = scmp.ne.s32.totalorder %s155, %s157
    %p161 = scmp.eq.s32.totalorder %s12, 0
    %p162 = por %p160, %p161
    %p163 = scmp.ne.s32.totalorder %s155, %s157
    %p164 = scmp.eq.s32.totalorder %s17, 5
    %p165 = por %p163, %p164
    %p166 = scmp.ne.s32.totalorder %s157, %s158
    %p167 = scmp.eq.s32.totalorder %s17, 0
    %p168 = por %p166, %p167
    %p169 = scmp.ne.s32.totalorder %s157, %s158
    %p170 = scmp.eq.s32.totalorder %s18, 5
    %p171 = por %p169, %p170
    %p173 = scmp.ne.s32.totalorder %s158, %s172
    %p174 = scmp.eq.s32.totalorder %s18, 0
    %p175 = por %p173, %p174
    %s176 = ssub.s32 %s19, %s31
    %s177 = ssub.s32 %s20, %s27
    %s178 = sor.u32 %s176, %s177
    %p179 = scmp.eq.s32.totalorder %s178, 0
    %s181 = sadd.s32 %s180, 1
    %s182 = scalar_select %p179, %s180, %s181
    %p185 = pneg %p179
    %p186 = scmp.eq.s32.totalorder %s12, 5
    %p187 = por %p185, %p186
    %p188 = scmp.ne.s32.totalorder %s180, %s183
    %p189 = scmp.eq.s32.totalorder %s12, 0
    %p190 = por %p188, %p189
    %p191 = scmp.ne.s32.totalorder %s180, %s183
    %p192 = scmp.eq.s32.totalorder %s17, 5
    %p193 = por %p191, %p192
    %p194 = scmp.ne.s32.totalorder %s183, %s184
    %p195 = scmp.eq.s32.totalorder %s17, 0
    %p196 = por %p194, %p195
    %p197 = scmp.ne.s32.totalorder %s183, %s184
    %p198 = scmp.eq.s32.totalorder %s18, 5
    %p199 = por %p197, %p198
    %p201 = scmp.ne.s32.totalorder %s184, %s200
    %p202 = scmp.eq.s32.totalorder %s18, 0
    %p203 = por %p201, %p202
    %p204 = scmp.le.s32.totalorder 1, %s12
    %p205 = scmp.lt.s32.totalorder %s12, 7
    %p206 = pnand %p204, %p205
    %p207 = pneg %p206
    // Predicated region
    $region9: #{convolutional_encoder_forward.4} parent=5 // pred_check
      _
    $region10: #{convolutional_encoder_forward.4} parent=5 // pred_check_branch
      %209 = sbr.rel (%p206) target = $region12
    $region11: #{convolutional_encoder_forward.4} parent=5 // pred_region
      %s210 = ssub.s32 %s12, 1
      // Predicated region
      $region13: #{convolutional_encoder_forward.4} parent=11 // pred_check
        %p211 = pneg %p105
      $region14: #{convolutional_encoder_forward.4} parent=11 // pred_check_branch
        %213 = sbr.rel (%p211) target = $region16
      $region15: #{convolutional_encoder_forward.4} parent=11 // pred_region
        _
      $region16: #{convolutional_encoder_forward.4} parent=11 // pred_fallthru
        _
      // Predicated region
      $region17: #{convolutional_encoder_forward.4} parent=11 // pred_check
        %p214 = pneg %p126
      $region18: #{convolutional_encoder_forward.4} parent=11 // pred_check_branch
        %216 = sbr.rel (%p214) target = $region20
      $region19: #{convolutional_encoder_forward.4} parent=11 // pred_region
        _
      $region20: #{convolutional_encoder_forward.4} parent=11 // pred_fallthru
        _
      // Predicated region
      $region21: #{convolutional_encoder_forward.4} parent=11 // pred_check
        %p217 = pneg %p147
      $region22: #{convolutional_encoder_forward.4} parent=11 // pred_check_branch
        %219 = sbr.rel (%p217) target = $region24
      $region23: #{convolutional_encoder_forward.4} parent=11 // pred_region
        _
      $region24: #{convolutional_encoder_forward.4} parent=11 // pred_fallthru
        _
      // Predicated region
      $region25: #{convolutional_encoder_forward.4} parent=11 // pred_check
        %p220 = pneg %p168
      $region26: #{convolutional_encoder_forward.4} parent=11 // pred_check_branch
        %222 = sbr.rel (%p220) target = $region28
      $region27: #{convolutional_encoder_forward.4} parent=11 // pred_region
        _
      $region28: #{convolutional_encoder_forward.4} parent=11 // pred_fallthru
        _
    $region12: #{convolutional_encoder_forward.4} parent=5 // pred_fallthru
      _
    %p223 = scmp.lt.s32.totalorder %s12, 6
    // Predicated region
    $region29: #{convolutional_encoder_forward.4} parent=5 // pred_check
      %p224 = pneg %p223
    $region30: #{convolutional_encoder_forward.4} parent=5 // pred_check_branch
      %226 = sbr.rel (%p224) target = $region32
    $region31: #{convolutional_encoder_forward.4} parent=5 // pred_region
      // Predicated region
      $region33: #{convolutional_encoder_forward.4} parent=31 // pred_check
        %p227 = pneg %p46
      $region34: #{convolutional_encoder_forward.4} parent=31 // pred_check_branch
        %229 = sbr.rel (%p227) target = $region36
      $region35: #{convolutional_encoder_forward.4} parent=31 // pred_region
        %s230 = smul.u32 2, %s20
        %s231 = ssub.s32 7, %s230
        %p232 = scmp.lt.s32.totalorder %s231, 2
        %s233 = scalar_select %p232, %s231, 2
        %s234 = smul.u32 8, %s233
        %p235 = scmp.lt.s32.totalorder %s19, 1
        %s236 = scalar_select %p235, %s19, 1
        %p237 = scmp.lt.s32.totalorder %s230, 6
        %s238 = scalar_select %p237, %s230, 6
        %s239 = smul.addr %s236, 7
        %s240 = sadd.s32 %s238, %s239
        %s241 = smul.addr %s240, 8
        %s242 = scalar_lea.vmem %s0, %s241
        %s243 = smul.u32 2, %s20
        %s244 = ssub.s32 7, %s243
        %p245 = scmp.lt.s32.totalorder %s244, 2
        %s246 = scalar_select %p245, %s244, 2
        %s247 = smul.u32 8, %s246
      $region36: #{convolutional_encoder_forward.4} parent=31 // pred_fallthru
        _
      // Predicated region
      $region37: #{convolutional_encoder_forward.4} parent=31 // pred_check
        %p248 = pneg %p78
      $region38: #{convolutional_encoder_forward.4} parent=31 // pred_check_branch
        %250 = sbr.rel (%p248) target = $region40
      $region39: #{convolutional_encoder_forward.4} parent=31 // pred_region
        %s251 = sadd.s32 %s20, 1
        %s252 = smul.u32 %s251, 2
        %p253 = scmp.lt.s32.totalorder %s19, 1
        %s254 = scalar_select %p253, %s19, 1
        %p255 = scmp.lt.s32.totalorder %s252, 6
        %s256 = scalar_select %p255, %s252, 6
        %s257 = smul.addr %s254, 7
        %s258 = sadd.s32 %s256, %s257
        %s259 = smul.addr %s258, 8
        %s260 = scalar_lea.vmem %s1, %s259
        %s261 = sadd.s32 %s20, 1
        %s262 = smul.u32 %s261, 2
      $region40: #{convolutional_encoder_forward.4} parent=31 // pred_fallthru
        _
    $region32: #{convolutional_encoder_forward.4} parent=5 // pred_fallthru
      _
    %p263 = scmp.le.s32.totalorder 1, %s12
    %p264 = scmp.lt.s32.totalorder %s12, 7
    %p265 = pnand %p263, %p264
    %p266 = pneg %p265
    // Predicated region
    $region41: #{convolutional_encoder_forward.4} parent=5 // pred_check
      _
    $region42: #{convolutional_encoder_forward.4} parent=5 // pred_check_branch
      %268 = sbr.rel (%p265) target = $region44
    $region43: #{convolutional_encoder_forward.4} parent=5 // pred_region
      %s269 = ssub.s32 %s12, 1
      %s270 = smul.u32 2, %s22
      %s271 = ssub.s32 7, %s270
      %p272 = scmp.lt.s32.totalorder %s271, 2
      %s273 = scalar_select %p272, %s271, 2
      %s274 = smul.u32 8, %s273
      %p275 = scmp.lt.s32.totalorder %s21, 1
      %s276 = scalar_select %p275, %s21, 1
      %p277 = scmp.lt.s32.totalorder %s270, 6
      %s278 = scalar_select %p277, %s270, 6
      %s279 = smul.addr %s276, 7
      %s280 = sadd.s32 %s278, %s279
      %s281 = smul.addr %s280, 8
      %s282 = scalar_lea.vmem %s0, %s281
      %p283 = pneg %p52
      %p284 = pneg %p49
      %s285 = sadd.s32 %s22, 1
      %s286 = smul.u32 %s285, 2
      %p287 = scmp.lt.s32.totalorder %s21, 1
      %s288 = scalar_select %p287, %s21, 1
      %p289 = scmp.lt.s32.totalorder %s286, 6
      %s290 = scalar_select %p289, %s286, 6
      %s291 = smul.addr %s288, 7
      %s292 = sadd.s32 %s290, %s291
      %s293 = smul.addr %s292, 8
      %s294 = scalar_lea.vmem %s1, %s293
      %p295 = pneg %p84
      %p296 = pneg %p81
      %p297 = pneg %p105
      %p298 = pneg %p102
      %p299 = pneg %p126
      %p300 = pneg %p123
      %p301 = pneg %p147
      %p302 = pneg %p144
      %p303 = pneg %p168
      %p304 = pneg %p165
      %p305 = pneg %p196
      %p306 = pneg %p193
      %s307 = smul.u32 2, %s22
      %p308 = scmp.lt.s32.totalorder %s21, 1
      %s309 = scalar_select %p308, %s21, 1
      %p310 = scmp.lt.s32.totalorder %s307, 5
      %s311 = scalar_select %p310, %s307, 5
      %s312 = smul.addr %s309, 6
      %s313 = sadd.s32 %s311, %s312
      %s314 = smul.addr %s313, 8
      %s315 = scalar_lea.vmem %s6, %s314
      %s316 = smul.u32 2, %s22
      %s317 = ssub.s32 7, %s316
      %p318 = scmp.lt.s32.totalorder %s317, 2
      %s319 = scalar_select %p318, %s317, 2
      %s320 = smul.u32 8, %s319
      %p321 = scmp.lt.s32.totalorder %s21, 1
      %s322 = scalar_select %p321, %s21, 1
      %p323 = scmp.lt.s32.totalorder %s316, 6
      %s324 = scalar_select %p323, %s316, 6
      %s325 = smul.addr %s322, 7
      %s326 = sadd.s32 %s324, %s325
      %s327 = smul.addr %s326, 8
      %s328 = scalar_lea.vmem %s0, %s327
      %s329 = smul.u32 2, %s22
      %s330 = ssub.s32 7, %s329
      %p331 = scmp.lt.s32.totalorder %s330, 2
      %s332 = scalar_select %p331, %s330, 2
      %s333 = smul.u32 8, %s332
      %s334 = sadd.s32 %s22, 1
      %s335 = smul.u32 %s334, 2
      %p336 = scmp.lt.s32.totalorder %s21, 1
      %s337 = scalar_select %p336, %s21, 1
      %p338 = scmp.lt.s32.totalorder %s335, 6
      %s339 = scalar_select %p338, %s335, 6
      %s340 = smul.addr %s337, 7
      %s341 = sadd.s32 %s339, %s340
      %s342 = smul.addr %s341, 8
      %s343 = scalar_lea.vmem %s1, %s342
      %s344 = sadd.s32 %s22, 1
      %s345 = smul.u32 %s344, 2
      %s346 = smul.u32 2, %s22
      %p347 = scmp.lt.s32.totalorder %s21, 1
      %s348 = scalar_select %p347, %s21, 1
      %p349 = scmp.lt.s32.totalorder %s346, 5
      %s350 = scalar_select %p349, %s346, 5
      %s351 = smul.addr %s348, 6
      %s352 = sadd.s32 %s350, %s351
      %s353 = smul.addr %s352, 8
      %s354 = scalar_lea.vmem %s6, %s353
      %s355 = smul.u32 2, %s22
      %s356 = smul.u32 %s22, 16
      %v357 = vld [vmem:[%s328] sm:$0xff]
      %v358 = vld [vmem:[%s328 + $0x8] sm:$0xff]
      %v359 = vld [vmem:[%s343] sm:$0xff]
      %v360 = vld [vmem:[%s2] sm:$0xff]
      %v361 = vld [vmem:[%s2 + $0x8] sm:$0xff]
      %v362 = vld [vmem:[%s2 + $0x10] sm:$0xff]
      %v363 = vld [vmem:[%s2 + $0x18] sm:$0xff]
      %v364 = vld [vmem:[%s2 + $0x20] sm:$0xff]
      %v365 = vld [vmem:[%s2 + $0x28] sm:$0xff]
      %v366 = vld [vmem:[%s2 + $0x30] sm:$0xff]
      %v367 = vld [vmem:[%s2 + $0x38] sm:$0xff]
      %s368 = scalar_lea.vmem %s2, 64
      %v369 = vld [vmem:[%s368] sm:$0xff]
      %v370 = vld [vmem:[%s368 + $0x8] sm:$0xff]
      %v371 = vld [vmem:[%s368 + $0x10] sm:$0xff]
      %v372 = vld [vmem:[%s368 + $0x18] sm:$0xff]
      %v373 = vld [vmem:[%s368 + $0x20] sm:$0xff]
      %v374 = vld [vmem:[%s368 + $0x28] sm:$0xff]
      %v375 = vld [vmem:[%s368 + $0x30] sm:$0xff]
      %v376 = vld [vmem:[%s368 + $0x38] sm:$0xff]
      %vm380 = vcmask 1046528
      %v381 = vrot.slane %v357, 1
      %v382 = vrot.slane %v358, 1
      %v383 = vsel %vm380, %v381, %v382
      %v384 = vrot.slane %v359, 1
      %v385 = vsel %vm380, %v382, %v384
      %vm386 = vcmask 523264
      %v387 = vsel %vm386, %v383, 0
      %v389 = vsel %vm386, %v385, 0
      %v391 = vsel %vm386, %v384, 0
      %393 = vmatpush.msra.mxu0 0.0
      %394 = vmatpush.msra.mxu0 0.0
      %395 = vmatpush.msra.mxu0 0.0
      %396 = vmatpush.msra.mxu0 0.0
      %397 = vmatpush.msra.mxu0 0.0
      %398 = vmatpush.msra.mxu0 0.0
      %399 = vmatpush.msra.mxu0 0.0
      %400 = vmatpush.msra.mxu0 0.0
      %401 = vmatpush.msra.mxu0 %v376
      %402 = vmatpush.msra.mxu0 %v375
      %403 = vmatpush.msra.mxu0 %v374
      %404 = vmatpush.msra.mxu0 %v373
      %405 = vmatpush.msra.mxu0 %v372
      %406 = vmatpush.msra.mxu0 %v371
      %407 = vmatpush.msra.mxu0 %v370
      %408 = vmatpush.msra.mxu0 %v369
      %409 = vmatmul.f32.gmra.mxu0 %v387
      %v410 = vpop.f32.mrf.mxu0
      %v411 = vadd.f32 0.0, %v410
      %412 = vmatmul.f32.gmra.mxu0 %v389
      %v413 = vpop.f32.mrf.mxu0
      %v414 = vadd.f32 0.0, %v413
      %415 = vmatmul.f32.gmra.mxu0 %v391
      %v416 = vpop.f32.mrf.mxu0
      %v417 = vadd.f32 0.0, %v416
      %418 = vdwg.mxu0
      %v419 = vsel %vm386, %v357, 0
      %v421 = vsel %vm386, %v358, 0
      %v423 = vsel %vm386, %v359, 0
      %425 = vmatpush.msra.mxu0 0.0
      %426 = vmatpush.msra.mxu0 0.0
      %427 = vmatpush.msra.mxu0 0.0
      %428 = vmatpush.msra.mxu0 0.0
      %429 = vmatpush.msra.mxu0 0.0
      %430 = vmatpush.msra.mxu0 0.0
      %431 = vmatpush.msra.mxu0 0.0
      %432 = vmatpush.msra.mxu0 0.0
      %433 = vmatpush.msra.mxu0 %v367
      %434 = vmatpush.msra.mxu0 %v366
      %435 = vmatpush.msra.mxu0 %v365
      %436 = vmatpush.msra.mxu0 %v364
      %437 = vmatpush.msra.mxu0 %v363
      %438 = vmatpush.msra.mxu0 %v362
      %439 = vmatpush.msra.mxu0 %v361
      %440 = vmatpush.msra.mxu0 %v360
      %441 = vmatmul.f32.gmra.mxu0 %v419
      %v442 = vpop.f32.mrf.mxu0
      %v443 = vadd.f32 %v411, %v442
      %444 = vmatmul.f32.gmra.mxu0 %v421
      %v445 = vpop.f32.mrf.mxu0
      %v446 = vadd.f32 %v414, %v445
      %447 = vmatmul.f32.gmra.mxu0 %v423
      %v448 = vpop.f32.mrf.mxu0
      %v449 = vadd.f32 %v417, %v448
      %450 = vdwg.mxu0
      %v451 = vld [vmem:[%s5] sm:$0x1]
      %v453 = vperm.slane %v451, 0
      %v455 = vadd.f32 %v443, %v453
      %v456 = vadd.f32 %v446, %v453
      %v457 = vadd.f32 %v449, %v453
      %v458 = vmax.f32 %v455, 0.0
      %v459 = vmax.f32 %v456, 0.0
      %v460 = vmax.f32 %v457, 0.0
      %s461 = ssub.s32 %s356, 2
      %v462 = vlaneseq
      %v463 = vshrl.u32 %v462, 7
      %v464 = vadd.s32 %v463, 8
      %v465 = vadd.s32 %v463, 16
      %v466 = vstv %s461
      %v467 = vadd.s32 %v463, %v466
      %v468 = vadd.s32 %v464, %v466
      %v469 = vadd.s32 %v465, %v466
      %vm470 = vcmp.ge.s32.totalorder %v467, 0
      %vm471 = vcmp.ge.s32.totalorder %v468, 0
      %vm472 = vcmp.ge.s32.totalorder %v469, 0
      %vm473 = vcmp.lt.s32.totalorder %v467, 33
      %vm474 = vcmp.lt.s32.totalorder %v468, 33
      %vm475 = vcmp.lt.s32.totalorder %v469, 33
      %vm476 = vmand %vm470, %vm473
      %vm477 = vmand %vm471, %vm474
      %vm478 = vmand %vm472, %vm475
      %v479 = vsel %vm476, 1, 0
      %v480 = vsel %vm477, 1, 0
      %v481 = vsel %vm478, 1, 0
      %vm482 = vcmp.eq.s32.totalorder %v479, 1
      %vm483 = vcmp.eq.s32.totalorder %v480, 1
      %vm484 = vcmp.eq.s32.totalorder %v481, 1
      %v485 = vsel %vm482, %v458, 0.0
      %v486 = vsel %vm483, %v459, 0.0
      %v487 = vsel %vm484, %v460, 0.0
      %v488 = vld [vmem:[%s3] sm:$0xff]
      %v489 = vld [vmem:[%s3 + $0x8] sm:$0xff]
      %v490 = vld [vmem:[%s3 + $0x10] sm:$0xff]
      %v491 = vld [vmem:[%s3 + $0x18] sm:$0xff]
      %s492 = scalar_lea.vmem %s3, 32
      %v493 = vld [vmem:[%s492] sm:$0xff]
      %v494 = vld [vmem:[%s492 + $0x8] sm:$0xff]
      %v495 = vld [vmem:[%s492 + $0x10] sm:$0xff]
      %v496 = vld [vmem:[%s492 + $0x18] sm:$0xff]
      %v500 = vrot.slane %v485, 1
      %v501 = vrot.slane %v486, 1
      %v502 = vsel %vm380, %v500, %v501
      %v503 = vrot.slane %v487, 1
      %v504 = vsel %vm380, %v501, %v503
      %vm505 = vcmask 261120
      %v506 = vsel %vm505, %v502, 0
      %v508 = vsel %vm505, %v504, 0
      %v510 = vsel %vm505, %v503, 0
      %512 = vmatpush.msra.mxu0 0.0
      %513 = vmatpush.msra.mxu0 0.0
      %514 = vmatpush.msra.mxu0 0.0
      %515 = vmatpush.msra.mxu0 0.0
      %516 = vmatpush.msra.mxu0 0.0
      %517 = vmatpush.msra.mxu0 0.0
      %518 = vmatpush.msra.mxu0 0.0
      %519 = vmatpush.msra.mxu0 0.0
      %520 = vmatpush.msra.mxu0 0.0
      %521 = vmatpush.msra.mxu0 0.0
      %522 = vmatpush.msra.mxu0 0.0
      %523 = vmatpush.msra.mxu0 0.0
      %524 = vmatpush.msra.mxu0 %v496
      %525 = vmatpush.msra.mxu0 %v495
      %526 = vmatpush.msra.mxu0 %v494
      %527 = vmatpush.msra.mxu0 %v493
      %528 = vmatmul.f32.gmra.mxu0 %v506
      %v529 = vpop.f32.mrf.mxu0
      %v530 = vadd.f32 0.0, %v529
      %531 = vmatmul.f32.gmra.mxu0 %v508
      %v532 = vpop.f32.mrf.mxu0
      %v533 = vadd.f32 0.0, %v532
      %534 = vmatmul.f32.gmra.mxu0 %v510
      %v535 = vpop.f32.mrf.mxu0
      %v536 = vadd.f32 0.0, %v535
      %537 = vdwg.mxu0
      %v538 = vsel %vm505, %v485, 0
      %v540 = vsel %vm505, %v486, 0
      %v542 = vsel %vm505, %v487, 0
      %544 = vmatpush.msra.mxu0 0.0
      %545 = vmatpush.msra.mxu0 0.0
      %546 = vmatpush.msra.mxu0 0.0
      %547 = vmatpush.msra.mxu0 0.0
      %548 = vmatpush.msra.mxu0 0.0
      %549 = vmatpush.msra.mxu0 0.0
      %550 = vmatpush.msra.mxu0 0.0
      %551 = vmatpush.msra.mxu0 0.0
      %552 = vmatpush.msra.mxu0 0.0
      %553 = vmatpush.msra.mxu0 0.0
      %554 = vmatpush.msra.mxu0 0.0
      %555 = vmatpush.msra.mxu0 0.0
      %556 = vmatpush.msra.mxu0 %v491
      %557 = vmatpush.msra.mxu0 %v490
      %558 = vmatpush.msra.mxu0 %v489
      %559 = vmatpush.msra.mxu0 %v488
      %560 = vmatmul.f32.gmra.mxu0 %v538
      %v561 = vpop.f32.mrf.mxu0
      %v562 = vadd.f32 %v530, %v561
      %563 = vmatmul.f32.gmra.mxu0 %v540
      %v564 = vpop.f32.mrf.mxu0
      %v565 = vadd.f32 %v533, %v564
      %566 = vmatmul.f32.gmra.mxu0 %v542
      %v567 = vpop.f32.mrf.mxu0
      %v568 = vadd.f32 %v536, %v567
      %569 = vdwg.mxu0
      %s570 = scalar_lea.vmem %s3, 64
      %v571 = vld [vmem:[%s570] sm:$0xff]
      %v572 = vld [vmem:[%s570 + $0x8] sm:$0xff]
      %v573 = vld [vmem:[%s570 + $0x10] sm:$0xff]
      %v574 = vld [vmem:[%s570 + $0x18] sm:$0xff]
      %vm575 = vcmask 1045504
      %v576 = vrot.slane %v485, 2
      %v577 = vrot.slane %v486, 2
      %v578 = vsel %vm575, %v576, %v577
      %v579 = vrot.slane %v487, 2
      %v580 = vsel %vm575, %v577, %v579
      %v581 = vsel %vm505, %v578, 0
      %v583 = vsel %vm505, %v580, 0
      %v585 = vsel %vm505, %v579, 0
      %587 = vmatpush.msra.mxu0 0.0
      %588 = vmatpush.msra.mxu0 0.0
      %589 = vmatpush.msra.mxu0 0.0
      %590 = vmatpush.msra.mxu0 0.0
      %591 = vmatpush.msra.mxu0 0.0
      %592 = vmatpush.msra.mxu0 0.0
      %593 = vmatpush.msra.mxu0 0.0
      %594 = vmatpush.msra.mxu0 0.0
      %595 = vmatpush.msra.mxu0 0.0
      %596 = vmatpush.msra.mxu0 0.0
      %597 = vmatpush.msra.mxu0 0.0
      %598 = vmatpush.msra.mxu0 0.0
      %599 = vmatpush.msra.mxu0 %v574
      %600 = vmatpush.msra.mxu0 %v573
      %601 = vmatpush.msra.mxu0 %v572
      %602 = vmatpush.msra.mxu0 %v571
      %603 = vmatmul.f32.gmra.mxu0 %v581
      %v604 = vpop.f32.mrf.mxu0
      %v605 = vadd.f32 0.0, %v604
      %606 = vmatmul.f32.gmra.mxu0 %v583
      %v607 = vpop.f32.mrf.mxu0
      %v608 = vadd.f32 0.0, %v607
      %609 = vmatmul.f32.gmra.mxu0 %v585
      %v610 = vpop.f32.mrf.mxu0
      %v611 = vadd.f32 0.0, %v610
      %612 = vdwg.mxu0
      %v613 = vadd.f32 %v562, %v605
      %v614 = vadd.f32 %v565, %v608
      %v615 = vadd.f32 %v568, %v611
      %s616 = scalar_lea.vmem %s5, 1
      %v617 = vld [vmem:[%s616] sm:$0x1]
      %v619 = vperm.slane %v617, 0
      %v621 = vadd.f32 %v613, %v619
      %v622 = vadd.f32 %v614, %v619
      %v623 = vadd.f32 %v615, %v619
      %v624 = vmax.f32 %v621, 0.0
      %v625 = vmax.f32 %v622, 0.0
      %v626 = vmax.f32 %v623, 0.0
      %v630 = vadd.f32 %v624, %v502
      %v631 = vadd.f32 %v625, %v504
      %v632 = vadd.f32 %v626, %v503
      %s633 = ssub.s32 %s356, 1
      %v634 = vstv %s633
      %v635 = vadd.s32 %v463, %v634
      %v636 = vadd.s32 %v464, %v634
      %v637 = vadd.s32 %v465, %v634
      %vm638 = vcmp.ge.s32.totalorder %v635, 0
      %vm639 = vcmp.ge.s32.totalorder %v636, 0
      %vm640 = vcmp.ge.s32.totalorder %v637, 0
      %vm641 = vcmp.lt.s32.totalorder %v635, 33
      %vm642 = vcmp.lt.s32.totalorder %v636, 33
      %vm643 = vcmp.lt.s32.totalorder %v637, 33
      %vm644 = vmand %vm638, %vm641
      %vm645 = vmand %vm639, %vm642
      %vm646 = vmand %vm640, %vm643
      %v647 = vsel %vm644, 1, 0
      %v648 = vsel %vm645, 1, 0
      %v649 = vsel %vm646, 1, 0
      %vm650 = vcmp.eq.s32.totalorder %v647, 1
      %vm651 = vcmp.eq.s32.totalorder %v648, 1
      %vm652 = vcmp.eq.s32.totalorder %v649, 1
      %v653 = vsel %vm650, %v630, 0.0
      %v654 = vsel %vm651, %v631, 0.0
      %v655 = vsel %vm652, %v632, 0.0
      %v656 = vld [vmem:[%s4] sm:$0xff]
      %v657 = vld [vmem:[%s4 + $0x8] sm:$0xff]
      %v658 = vld [vmem:[%s4 + $0x10] sm:$0xff]
      %v659 = vld [vmem:[%s4 + $0x18] sm:$0xff]
      %s660 = scalar_lea.vmem %s4, 32
      %v661 = vld [vmem:[%s660] sm:$0xff]
      %v662 = vld [vmem:[%s660 + $0x8] sm:$0xff]
      %v663 = vld [vmem:[%s660 + $0x10] sm:$0xff]
      %v664 = vld [vmem:[%s660 + $0x18] sm:$0xff]
      %v668 = vrot.slane %v653, 1
      %v669 = vrot.slane %v654, 1
      %v670 = vsel %vm380, %v668, %v669
      %v671 = vrot.slane %v655, 1
      %v672 = vsel %vm380, %v669, %v671
      %v673 = vsel %vm505, %v670, 0
      %v675 = vsel %vm505, %v672, 0
      %677 = vmatpush.msra.mxu0 0.0
      %678 = vmatpush.msra.mxu0 0.0
      %679 = vmatpush.msra.mxu0 0.0
      %680 = vmatpush.msra.mxu0 0.0
      %681 = vmatpush.msra.mxu0 0.0
      %682 = vmatpush.msra.mxu0 0.0
      %683 = vmatpush.msra.mxu0 0.0
      %684 = vmatpush.msra.mxu0 0.0
      %685 = vmatpush.msra.mxu0 0.0
      %686 = vmatpush.msra.mxu0 0.0
      %687 = vmatpush.msra.mxu0 0.0
      %688 = vmatpush.msra.mxu0 0.0
      %689 = vmatpush.msra.mxu0 %v664
      %690 = vmatpush.msra.mxu0 %v663
      %691 = vmatpush.msra.mxu0 %v662
      %692 = vmatpush.msra.mxu0 %v661
      %693 = vmatmul.f32.gmra.mxu0 %v673
      %v694 = vpop.f32.mrf.mxu0
      %v695 = vadd.f32 0.0, %v694
      %696 = vmatmul.f32.gmra.mxu0 %v675
      %v697 = vpop.f32.mrf.mxu0
      %v698 = vadd.f32 0.0, %v697
      %699 = vdwg.mxu0
      %v700 = vsel %vm505, %v653, 0
      %v702 = vsel %vm505, %v654, 0
      %704 = vmatpush.msra.mxu0 0.0
      %705 = vmatpush.msra.mxu0 0.0
      %706 = vmatpush.msra.mxu0 0.0
      %707 = vmatpush.msra.mxu0 0.0
      %708 = vmatpush.msra.mxu0 0.0
      %709 = vmatpush.msra.mxu0 0.0
      %710 = vmatpush.msra.mxu0 0.0
      %711 = vmatpush.msra.mxu0 0.0
      %712 = vmatpush.msra.mxu0 0.0
      %713 = vmatpush.msra.mxu0 0.0
      %714 = vmatpush.msra.mxu0 0.0
      %715 = vmatpush.msra.mxu0 0.0
      %716 = vmatpush.msra.mxu0 %v659
      %717 = vmatpush.msra.mxu0 %v658
      %718 = vmatpush.msra.mxu0 %v657
      %719 = vmatpush.msra.mxu0 %v656
      %720 = vmatmul.f32.gmra.mxu0 %v700
      %v721 = vpop.f32.mrf.mxu0
      %v722 = vadd.f32 %v695, %v721
      %723 = vmatmul.f32.gmra.mxu0 %v702
      %v724 = vpop.f32.mrf.mxu0
      %v725 = vadd.f32 %v698, %v724
      %726 = vdwg.mxu0
      %s727 = scalar_lea.vmem %s4, 64
      %v728 = vld [vmem:[%s727] sm:$0xff]
      %v729 = vld [vmem:[%s727 + $0x8] sm:$0xff]
      %v730 = vld [vmem:[%s727 + $0x10] sm:$0xff]
      %v731 = vld [vmem:[%s727 + $0x18] sm:$0xff]
      %v732 = vrot.slane %v653, 2
      %v733 = vrot.slane %v654, 2
      %v734 = vsel %vm575, %v732, %v733
      %v735 = vrot.slane %v655, 2
      %v736 = vsel %vm575, %v733, %v735
      %v737 = vsel %vm505, %v734, 0
      %v739 = vsel %vm505, %v736, 0
      %741 = vmatpush.msra.mxu0 0.0
      %742 = vmatpush.msra.mxu0 0.0
      %743 = vmatpush.msra.mxu0 0.0
      %744 = vmatpush.msra.mxu0 0.0
      %745 = vmatpush.msra.mxu0 0.0
      %746 = vmatpush.msra.mxu0 0.0
      %747 = vmatpush.msra.mxu0 0.0
      %748 = vmatpush.msra.mxu0 0.0
      %749 = vmatpush.msra.mxu0 0.0
      %750 = vmatpush.msra.mxu0 0.0
      %751 = vmatpush.msra.mxu0 0.0
      %752 = vmatpush.msra.mxu0 0.0
      %753 = vmatpush.msra.mxu0 %v731
      %754 = vmatpush.msra.mxu0 %v730
      %755 = vmatpush.msra.mxu0 %v729
      %756 = vmatpush.msra.mxu0 %v728
      %757 = vmatmul.f32.gmra.mxu0 %v737
      %v758 = vpop.f32.mrf.mxu0
      %v759 = vadd.f32 0.0, %v758
      %760 = vmatmul.f32.gmra.mxu0 %v739
      %v761 = vpop.f32.mrf.mxu0
      %v762 = vadd.f32 0.0, %v761
      %763 = vdwg.mxu0
      %v764 = vadd.f32 %v722, %v759
      %v765 = vadd.f32 %v725, %v762
      %s766 = scalar_lea.vmem %s5, 2
      %v767 = vld [vmem:[%s766] sm:$0x1]
      %v769 = vperm.slane %v767, 0
      %v771 = vadd.f32 %v764, %v769
      %v772 = vadd.f32 %v765, %v769
      %v773 = vmax.f32 %v771, 0.0
      %v774 = vmax.f32 %v772, 0.0
      %v777 = vadd.f32 %v773, %v670
      %v778 = vadd.f32 %v774, %v672
      %779 = vst.msk [vmem:[%s354] sm:$0xff] %vm505, %v777
      %780 = vst.msk [vmem:[%s354 + $0x8] sm:$0xff] %vm505, %v778
      %s781 = smul.u32 2, %s22
      %p782 = scmp.lt.s32.totalorder %s21, 1
      %s783 = scalar_select %p782, %s21, 1
      %p784 = scmp.lt.s32.totalorder %s781, 5
      %s785 = scalar_select %p784, %s781, 5
      %s786 = smul.addr %s783, 6
      %s787 = sadd.s32 %s785, %s786
      %s788 = smul.addr %s787, 8
      %s789 = scalar_lea.vmem %s6, %s788
      // Predicated region
      $region45: #{convolutional_encoder_forward.4} parent=43 // pred_check
        %p790 = pneg %p193
      $region46: #{convolutional_encoder_forward.4} parent=43 // pred_check_branch
        %792 = sbr.rel (%p790) target = $region48
      $region47: #{convolutional_encoder_forward.4} parent=43 // pred_region
        %s793 = smul.u32 2, %s22
      $region48: #{convolutional_encoder_forward.4} parent=43 // pred_fallthru
        _
    $region44: #{convolutional_encoder_forward.4} parent=5 // pred_fallthru
      _
    %p794 = scmp.le.s32.totalorder 2, %s12
    // Predicated region
    $region49: #{convolutional_encoder_forward.4} parent=5 // pred_check
      %p795 = pneg %p794
    $region50: #{convolutional_encoder_forward.4} parent=5 // pred_check_branch
      %797 = sbr.rel (%p795) target = $region52
    $region51: #{convolutional_encoder_forward.4} parent=5 // pred_region
      %s798 = ssub.s32 %s12, 2
      // Predicated region
      $region53: #{convolutional_encoder_forward.4} parent=51 // pred_check
        %p799 = pneg %p199
      $region54: #{convolutional_encoder_forward.4} parent=51 // pred_check_branch
        %801 = sbr.rel (%p799) target = $region56
      $region55: #{convolutional_encoder_forward.4} parent=51 // pred_region
        %s802 = smul.u32 2, %s24
        %p803 = scmp.lt.s32.totalorder %s23, 1
        %s804 = scalar_select %p803, %s23, 1
        %p805 = scmp.lt.s32.totalorder %s802, 5
        %s806 = scalar_select %p805, %s802, 5
        %s807 = smul.addr %s804, 6
        %s808 = sadd.s32 %s806, %s807
        %s809 = smul.addr %s808, 8
        %s810 = scalar_lea.vmem %s6, %s809
      $region56: #{convolutional_encoder_forward.4} parent=51 // pred_fallthru
        _
    $region52: #{convolutional_encoder_forward.4} parent=5 // pred_fallthru
      _
  $region6: #{convolutional_encoder_forward.4} parent=0 // loop_footer
    %s16 = sadd.s32 1, %s12
  $region7: #{convolutional_encoder_forward.4} parent=0 // loop_footer_branch
    %11 = sbr.rel target = $region3
  $region8: #{convolutional_encoder_forward.4} parent=0 // loop_exit
    _

// kernel: convolutional_encoder_forward.5
$region0: #{convolutional_encoder_forward.5}
  #allocation0 [shape = 'u32[]', space=smem, size = 0x4, offset = 0x4, fixed_abs, tag = 'smem constant byte address 0x4 - core index']
  #allocation1 [shape = 'u32[72,128]{1,0:T(1,128)}', space=vmem, size = 0x9000, scoped, tag = 'internal scratch']
  %s0 = inlined_call_operand.vmem [shape: f32[2,56,32], index: 0, kind: input, shape index: {}, may-alias: {0,1}]
  %s1 = inlined_call_operand.vmem [shape: f32[2,56,32], index: 1, kind: input, shape index: {}, may-alias: {0,1}]
  %s2 = inlined_call_operand.vmem [shape: f32[2,3,32,8], index: 2, kind: input, shape index: {}]
  %s3 = inlined_call_operand.vmem [shape: f32[2,8,32], index: 3, kind: input, shape index: {}]
  %s4 = inlined_call_operand.vmem [shape: f32[2,48,32], index: 4, kind: output, shape index: {}]
  %s5 = sld [smem:[#allocation0]]
  $region49: #{convolutional_encoder_forward.5} parent=0
    _
  %s7 = ssub.s32 1, %s5
  %s8 = scalar_select 0, %s7, %s5
  loop: start=0, step=1, limit=8
  $region2: #{convolutional_encoder_forward.5} parent=0 // loop_pre_header
    _
  $region3: #{convolutional_encoder_forward.5} parent=0 // loop_header
    %s10 = sphi 0, %s14
    %p11 = scmp.ge.s32.totalorder %s10, 8
    %s17 = sphi 0, %s29
    %s18 = sphi 0, %s25
    %s19 = sphi 0, %s17
    %s20 = sphi 0, %s18
    %s21 = sphi 0, %s19
    %s22 = sphi 0, %s20
    %s34 = sphi 0, %s36
    %s37 = sphi 0, %s34
    %s38 = sphi 0, %s37
    %s54 = sphi 0, %s38
    %s66 = sphi 0, %s68
    %s69 = sphi 0, %s66
    %s70 = sphi 0, %s69
    %s86 = sphi 0, %s70
    %s90 = sphi 0, %s90
    %s92 = sphi 0, %s90
    %s93 = sphi 0, %s92
    %s107 = sphi 0, %s93
    %s111 = sphi 0, %s111
    %s113 = sphi 0, %s111
    %s114 = sphi 0, %s113
    %s128 = sphi 0, %s114
    %s136 = sphi 0, %s138
    %s139 = sphi 0, %s136
    %s140 = sphi 0, %s139
    %s156 = sphi 0, %s140
  $region4: #{convolutional_encoder_forward.5} parent=0 // loop_header_branch
    %13 = sbr.rel (%p11) target = $region8
  $region5: #{convolutional_encoder_forward.5} parent=0 // loop_body
    %s15 = ssub.s32 %s10, 1
    %s16 = ssub.s32 %s10, 2
    %s23 = sadd.s32 1, %s18
    %p24 = scmp.ge.s32.totalorder %s23, 3
    %s25 = scalar_select %p24, 0, %s23
    %s26 = sadd.s32 1, %s17
    %s27 = scalar_select %p24, %s26, %s17
    %p28 = scmp.ge.s32.totalorder %s27, 2
    %s29 = scalar_select %p28, 0, %s27
    %s30 = ssub.s32 %s17, %s29
    %s31 = ssub.s32 %s18, %s25
    %s32 = sor.u32 %s30, %s31
    %p33 = scmp.eq.s32.totalorder %s32, 0
    %s35 = sadd.s32 %s34, 1
    %s36 = scalar_select %p33, %s34, %s35
    %p39 = pneg %p33
    %p40 = scmp.eq.s32.totalorder %s10, 5
    %p41 = por %p39, %p40
    %p42 = scmp.ne.s32.totalorder %s34, %s37
    %p43 = scmp.eq.s32.totalorder %s10, 0
    %p44 = por %p42, %p43
    %p45 = scmp.ne.s32.totalorder %s34, %s37
    %p46 = scmp.eq.s32.totalorder %s15, 5
    %p47 = por %p45, %p46
    %p48 = scmp.ne.s32.totalorder %s37, %s38
    %p49 = scmp.eq.s32.totalorder %s15, 0
    %p50 = por %p48, %p49
    %p51 = scmp.ne.s32.totalorder %s37, %s38
    %p52 = scmp.eq.s32.totalorder %s16, 5
    %p53 = por %p51, %p52
    %p55 = scmp.ne.s32.totalorder %s38, %s54
    %p56 = scmp.eq.s32.totalorder %s16, 0
    %p57 = por %p55, %p56
    %s58 = sadd.s32 %s18, 1
    %s59 = smul.u32 %s58, 2
    %s60 = sadd.s32 %s25, 1
    %s61 = smul.u32 %s60, 2
    %s62 = ssub.s32 %s17, %s29
    %s63 = ssub.s32 %s59, %s61
    %s64 = sor.u32 %s62, %s63
    %p65 = scmp.eq.s32.totalorder %s64, 0
    %s67 = sadd.s32 %s66, 1
    %s68 = scalar_select %p65, %s66, %s67
    %p71 = pneg %p65
    %p72 = scmp.eq.s32.totalorder %s10, 5
    %p73 = por %p71, %p72
    %p74 = scmp.ne.s32.totalorder %s66, %s69
    %p75 = scmp.eq.s32.totalorder %s10, 0
    %p76 = por %p74, %p75
    %p77 = scmp.ne.s32.totalorder %s66, %s69
    %p78 = scmp.eq.s32.totalorder %s15, 5
    %p79 = por %p77, %p78
    %p80 = scmp.ne.s32.totalorder %s69, %s70
    %p81 = scmp.eq.s32.totalorder %s15, 0
    %p82 = por %p80, %p81
    %p83 = scmp.ne.s32.totalorder %s69, %s70
    %p84 = scmp.eq.s32.totalorder %s16, 5
    %p85 = por %p83, %p84
    %p87 = scmp.ne.s32.totalorder %s70, %s86
    %p88 = scmp.eq.s32.totalorder %s16, 0
    %p89 = por %p87, %p88
    %s91 = sadd.s32 %s90, 1
    %p94 = scmp.eq.s32.totalorder %s10, 5
    %p95 = scmp.ne.s32.totalorder %s90, %s92
    %p96 = scmp.eq.s32.totalorder %s10, 0
    %p97 = por %p95, %p96
    %p98 = scmp.ne.s32.totalorder %s90, %s92
    %p99 = scmp.eq.s32.totalorder %s15, 5
    %p100 = por %p98, %p99
    %p101 = scmp.ne.s32.totalorder %s92, %s93
    %p102 = scmp.eq.s32.totalorder %s15, 0
    %p103 = por %p101, %p102
    %p104 = scmp.ne.s32.totalorder %s92, %s93
    %p105 = scmp.eq.s32.totalorder %s16, 5
    %p106 = por %p104, %p105
    %p108 = scmp.ne.s32.totalorder %s93, %s107
    %p109 = scmp.eq.s32.totalorder %s16, 0
    %p110 = por %p108, %p109
    %s112 = sadd.s32 %s111, 1
    %p115 = scmp.eq.s32.totalorder %s10, 5
    %p116 = scmp.ne.s32.totalorder %s111, %s113
    %p117 = scmp.eq.s32.totalorder %s10, 0
    %p118 = por %p116, %p117
    %p119 = scmp.ne.s32.totalorder %s111, %s113
    %p120 = scmp.eq.s32.totalorder %s15, 5
    %p121 = por %p119, %p120
    %p122 = scmp.ne.s32.totalorder %s113, %s114
    %p123 = scmp.eq.s32.totalorder %s15, 0
    %p124 = por %p122, %p123
    %p125 = scmp.ne.s32.totalorder %s113, %s114
    %p126 = scmp.eq.s32.totalorder %s16, 5
    %p127 = por %p125, %p126
    %p129 = scmp.ne.s32.totalorder %s114, %s128
    %p130 = scmp.eq.s32.totalorder %s16, 0
    %p131 = por %p129, %p130
    %s132 = ssub.s32 %s17, %s29
    %s133 = ssub.s32 %s18, %s25
    %s134 = sor.u32 %s132, %s133
    %p135 = scmp.eq.s32.totalorder %s134, 0
    %s137 = sadd.s32 %s136, 1
    %s138 = scalar_select %p135, %s136, %s137
    %p141 = pneg %p135
    %p142 = scmp.eq.s32.totalorder %s10, 5
    %p143 = por %p141, %p142
    %p144 = scmp.ne.s32.totalorder %s136, %s139
    %p145 = scmp.eq.s32.totalorder %s10, 0
    %p146 = por %p144, %p145
    %p147 = scmp.ne.s32.totalorder %s136, %s139
    %p148 = scmp.eq.s32.totalorder %s15, 5
    %p149 = por %p147, %p148
    %p150 = scmp.ne.s32.totalorder %s139, %s140
    %p151 = scmp.eq.s32.totalorder %s15, 0
    %p152 = por %p150, %p151
    %p153 = scmp.ne.s32.totalorder %s139, %s140
    %p154 = scmp.eq.s32.totalorder %s16, 5
    %p155 = por %p153, %p154
    %p157 = scmp.ne.s32.totalorder %s140, %s156
    %p158 = scmp.eq.s32.totalorder %s16, 0
    %p159 = por %p157, %p158
    %p160 = scmp.le.s32.totalorder 1, %s10
    %p161 = scmp.lt.s32.totalorder %s10, 7
    %p162 = pnand %p160, %p161
    %p163 = pneg %p162
    // Predicated region
    $region9: #{convolutional_encoder_forward.5} parent=5 // pred_check
      _
    $region10: #{convolutional_encoder_forward.5} parent=5 // pred_check_branch
      %165 = sbr.rel (%p162) target = $region12
    $region11: #{convolutional_encoder_forward.5} parent=5 // pred_region
      %s166 = ssub.s32 %s10, 1
      // Predicated region
      $region13: #{convolutional_encoder_forward.5} parent=11 // pred_check
        %p167 = pneg %p103
      $region14: #{convolutional_encoder_forward.5} parent=11 // pred_check_branch
        %169 = sbr.rel (%p167) target = $region16
      $region15: #{convolutional_encoder_forward.5} parent=11 // pred_region
        _
      $region16: #{convolutional_encoder_forward.5} parent=11 // pred_fallthru
        _
      // Predicated region
      $region17: #{convolutional_encoder_forward.5} parent=11 // pred_check
        %p170 = pneg %p124
      $region18: #{convolutional_encoder_forward.5} parent=11 // pred_check_branch
        %172 = sbr.rel (%p170) target = $region20
      $region19: #{convolutional_encoder_forward.5} parent=11 // pred_region
        _
      $region20: #{convolutional_encoder_forward.5} parent=11 // pred_fallthru
        _
    $region12: #{convolutional_encoder_forward.5} parent=5 // pred_fallthru
      _
    %p173 = scmp.lt.s32.totalorder %s10, 6
    // Predicated region
    $region21: #{convolutional_encoder_forward.5} parent=5 // pred_check
      %p174 = pneg %p173
    $region22: #{convolutional_encoder_forward.5} parent=5 // pred_check_branch
      %176 = sbr.rel (%p174) target = $region24
    $region23: #{convolutional_encoder_forward.5} parent=5 // pred_region
      // Predicated region
      $region25: #{convolutional_encoder_forward.5} parent=23 // pred_check
        %p177 = pneg %p44
      $region26: #{convolutional_encoder_forward.5} parent=23 // pred_check_branch
        %179 = sbr.rel (%p177) target = $region28
      $region27: #{convolutional_encoder_forward.5} parent=23 // pred_region
        %s180 = smul.u32 2, %s18
        %s181 = ssub.s32 7, %s180
        %p182 = scmp.lt.s32.totalorder %s181, 2
        %s183 = scalar_select %p182, %s181, 2
        %s184 = smul.u32 8, %s183
        %p185 = scmp.lt.s32.totalorder %s17, 1
        %s186 = scalar_select %p185, %s17, 1
        %p187 = scmp.lt.s32.totalorder %s180, 6
        %s188 = scalar_select %p187, %s180, 6
        %s189 = smul.addr %s186, 7
        %s190 = sadd.s32 %s188, %s189
        %s191 = smul.addr %s190, 8
        %s192 = scalar_lea.vmem %s0, %s191
        %s193 = smul.u32 2, %s18
        %s194 = ssub.s32 7, %s193
        %p195 = scmp.lt.s32.totalorder %s194, 2
        %s196 = scalar_select %p195, %s194, 2
        %s197 = smul.u32 8, %s196
      $region28: #{convolutional_encoder_forward.5} parent=23 // pred_fallthru
        _
      // Predicated region
      $region29: #{convolutional_encoder_forward.5} parent=23 // pred_check
        %p198 = pneg %p76
      $region30: #{convolutional_encoder_forward.5} parent=23 // pred_check_branch
        %200 = sbr.rel (%p198) target = $region32
      $region31: #{convolutional_encoder_forward.5} parent=23 // pred_region
        %s201 = sadd.s32 %s18, 1
        %s202 = smul.u32 %s201, 2
        %p203 = scmp.lt.s32.totalorder %s17, 1
        %s204 = scalar_select %p203, %s17, 1
        %p205 = scmp.lt.s32.totalorder %s202, 6
        %s206 = scalar_select %p205, %s202, 6
        %s207 = smul.addr %s204, 7
        %s208 = sadd.s32 %s206, %s207
        %s209 = smul.addr %s208, 8
        %s210 = scalar_lea.vmem %s1, %s209
        %s211 = sadd.s32 %s18, 1
        %s212 = smul.u32 %s211, 2
      $region32: #{convolutional_encoder_forward.5} parent=23 // pred_fallthru
        _
    $region24: #{convolutional_encoder_forward.5} parent=5 // pred_fallthru
      _
    %p213 = scmp.le.s32.totalorder 1, %s10
    %p214 = scmp.lt.s32.totalorder %s10, 7
    %p215 = pnand %p213, %p214
    %p216 = pneg %p215
    // Predicated region
    $region33: #{convolutional_encoder_forward.5} parent=5 // pred_check
      _
    $region34: #{convolutional_encoder_forward.5} parent=5 // pred_check_branch
      %218 = sbr.rel (%p215) target = $region36
    $region35: #{convolutional_encoder_forward.5} parent=5 // pred_region
      %s219 = ssub.s32 %s10, 1
      %s220 = smul.u32 2, %s20
      %s221 = ssub.s32 7, %s220
      %p222 = scmp.lt.s32.totalorder %s221, 2
      %s223 = scalar_select %p222, %s221, 2
      %s224 = smul.u32 8, %s223
      %p225 = scmp.lt.s32.totalorder %s19, 1
      %s226 = scalar_select %p225, %s19, 1
      %p227 = scmp.lt.s32.totalorder %s220, 6
      %s228 = scalar_select %p227, %s220, 6
      %s229 = smul.addr %s226, 7
      %s230 = sadd.s32 %s228, %s229
      %s231 = smul.addr %s230, 8
      %s232 = scalar_lea.vmem %s0, %s231
      %p233 = pneg %p50
      %p234 = pneg %p47
      %s235 = sadd.s32 %s20, 1
      %s236 = smul.u32 %s235, 2
      %p237 = scmp.lt.s32.totalorder %s19, 1
      %s238 = scalar_select %p237, %s19, 1
      %p239 = scmp.lt.s32.totalorder %s236, 6
      %s240 = scalar_select %p239, %s236, 6
      %s241 = smul.addr %s238, 7
      %s242 = sadd.s32 %s240, %s241
      %s243 = smul.addr %s242, 8
      %s244 = scalar_lea.vmem %s1, %s243
      %p245 = pneg %p82
      %p246 = pneg %p79
      %p247 = pneg %p103
      %p248 = pneg %p100
      %p249 = pneg %p124
      %p250 = pneg %p121
      %p251 = pneg %p152
      %p252 = pneg %p149
      %s253 = smul.u32 2, %s20
      %p254 = scmp.lt.s32.totalorder %s19, 1
      %s255 = scalar_select %p254, %s19, 1
      %p256 = scmp.lt.s32.totalorder %s253, 5
      %s257 = scalar_select %p256, %s253, 5
      %s258 = smul.addr %s255, 6
      %s259 = sadd.s32 %s257, %s258
      %s260 = smul.addr %s259, 8
      %s261 = scalar_lea.vmem %s4, %s260
      %s262 = smul.u32 2, %s20
      %s263 = ssub.s32 7, %s262
      %p264 = scmp.lt.s32.totalorder %s263, 2
      %s265 = scalar_select %p264, %s263, 2
      %s266 = smul.u32 8, %s265
      %p267 = scmp.lt.s32.totalorder %s19, 1
      %s268 = scalar_select %p267, %s19, 1
      %p269 = scmp.lt.s32.totalorder %s262, 6
      %s270 = scalar_select %p269, %s262, 6
      %s271 = smul.addr %s268, 7
      %s272 = sadd.s32 %s270, %s271
      %s273 = smul.addr %s272, 8
      %s274 = scalar_lea.vmem %s0, %s273
      %s275 = smul.u32 2, %s20
      %s276 = ssub.s32 7, %s275
      %p277 = scmp.lt.s32.totalorder %s276, 2
      %s278 = scalar_select %p277, %s276, 2
      %s279 = smul.u32 8, %s278
      %s280 = sadd.s32 %s20, 1
      %s281 = smul.u32 %s280, 2
      %p282 = scmp.lt.s32.totalorder %s19, 1
      %s283 = scalar_select %p282, %s19, 1
      %p284 = scmp.lt.s32.totalorder %s281, 6
      %s285 = scalar_select %p284, %s281, 6
      %s286 = smul.addr %s283, 7
      %s287 = sadd.s32 %s285, %s286
      %s288 = smul.addr %s287, 8
      %s289 = scalar_lea.vmem %s1, %s288
      %s290 = sadd.s32 %s20, 1
      %s291 = smul.u32 %s290, 2
      %s292 = smul.u32 2, %s20
      %p293 = scmp.lt.s32.totalorder %s19, 1
      %s294 = scalar_select %p293, %s19, 1
      %p295 = scmp.lt.s32.totalorder %s292, 5
      %s296 = scalar_select %p295, %s292, 5
      %s297 = smul.addr %s294, 6
      %s298 = sadd.s32 %s296, %s297
      %s299 = smul.addr %s298, 8
      %s300 = scalar_lea.vmem %s4, %s299
      %s301 = smul.u32 2, %s20
      %s302 = smul.u32 %s20, 16
      %v303 = vld [vmem:[%s274] sm:$0xff]
      %v304 = vld [vmem:[%s274 + $0x8] sm:$0xff]
      %v305 = vld [vmem:[%s289] sm:$0xff]
      %s306 = ssub.s32 %s302, 2
      %v307 = vlaneseq
      %v308 = vshrl.u32 %v307, 7
      %v309 = vadd.s32 %v308, 8
      %v310 = vadd.s32 %v308, 16
      %v311 = vstv %s306
      %v312 = vadd.s32 %v308, %v311
      %v313 = vadd.s32 %v309, %v311
      %v314 = vadd.s32 %v310, %v311
      %vm315 = vcmp.ge.s32.totalorder %v312, 0
      %vm316 = vcmp.ge.s32.totalorder %v313, 0
      %vm317 = vcmp.ge.s32.totalorder %v314, 0
      %vm318 = vcmp.lt.s32.totalorder %v312, 33
      %vm319 = vcmp.lt.s32.totalorder %v313, 33
      %vm320 = vcmp.lt.s32.totalorder %v314, 33
      %vm321 = vmand %vm315, %vm318
      %vm322 = vmand %vm316, %vm319
      %vm323 = vmand %vm317, %vm320
      %v324 = vmax.f32 %v303, 0.0
      %v325 = vmax.f32 %v304, 0.0
      %v326 = vmax.f32 %v305, 0.0
      %v327 = vsel %vm321, 1, 0
      %v328 = vsel %vm322, 1, 0
      %v329 = vsel %vm323, 1, 0
      %vm330 = vcmp.eq.s32.totalorder %v327, 1
      %vm331 = vcmp.eq.s32.totalorder %v328, 1
      %vm332 = vcmp.eq.s32.totalorder %v329, 1
      %v333 = vsel %vm330, %v324, 0.0
      %v334 = vsel %vm331, %v325, 0.0
      %v335 = vsel %vm332, %v326, 0.0
      %v336 = vld [vmem:[%s2] sm:$0xff]
      %v337 = vld [vmem:[%s2 + $0x8] sm:$0xff]
      %v338 = vld [vmem:[%s2 + $0x10] sm:$0xff]
      %v339 = vld [vmem:[%s2 + $0x18] sm:$0xff]
      %s340 = scalar_lea.vmem %s2, 32
      %v341 = vld [vmem:[%s340] sm:$0xff]
      %v342 = vld [vmem:[%s340 + $0x8] sm:$0xff]
      %v343 = vld [vmem:[%s340 + $0x10] sm:$0xff]
      %v344 = vld [vmem:[%s340 + $0x18] sm:$0xff]
      %vm348 = vcmask 1046528
      %v349 = vrot.slane %v333, 1
      %v350 = vrot.slane %v334, 1
      %v351 = vsel %vm348, %v349, %v350
      %v352 = vrot.slane %v335, 1
      %v353 = vsel %vm348, %v350, %v352
      %vm354 = vcmask 261120
      %v355 = vsel %vm354, %v351, 0
      %v357 = vsel %vm354, %v353, 0
      %v359 = vsel %vm354, %v352, 0
      %361 = vmatpush.msra.mxu0 0.0
      %362 = vmatpush.msra.mxu0 0.0
      %363 = vmatpush.msra.mxu0 0.0
      %364 = vmatpush.msra.mxu0 0.0
      %365 = vmatpush.msra.mxu0 0.0
      %366 = vmatpush.msra.mxu0 0.0
      %367 = vmatpush.msra.mxu0 0.0
      %368 = vmatpush.msra.mxu0 0.0
      %369 = vmatpush.msra.mxu0 0.0
      %370 = vmatpush.msra.mxu0 0.0
      %371 = vmatpush.msra.mxu0 0.0
      %372 = vmatpush.msra.mxu0 0.0
      %373 = vmatpush.msra.mxu0 %v344
      %374 = vmatpush.msra.mxu0 %v343
      %375 = vmatpush.msra.mxu0 %v342
      %376 = vmatpush.msra.mxu0 %v341
      %377 = vmatmul.f32.gmra.mxu0 %v355
      %v378 = vpop.f32.mrf.mxu0
      %v379 = vadd.f32 0.0, %v378
      %380 = vmatmul.f32.gmra.mxu0 %v357
      %v381 = vpop.f32.mrf.mxu0
      %v382 = vadd.f32 0.0, %v381
      %383 = vmatmul.f32.gmra.mxu0 %v359
      %v384 = vpop.f32.mrf.mxu0
      %v385 = vadd.f32 0.0, %v384
      %386 = vdwg.mxu0
      %v387 = vsel %vm354, %v333, 0
      %v389 = vsel %vm354, %v334, 0
      %v391 = vsel %vm354, %v335, 0
      %393 = vmatpush.msra.mxu0 0.0
      %394 = vmatpush.msra.mxu0 0.0
      %395 = vmatpush.msra.mxu0 0.0
      %396 = vmatpush.msra.mxu0 0.0
      %397 = vmatpush.msra.mxu0 0.0
      %398 = vmatpush.msra.mxu0 0.0
      %399 = vmatpush.msra.mxu0 0.0
      %400 = vmatpush.msra.mxu0 0.0
      %401 = vmatpush.msra.mxu0 0.0
      %402 = vmatpush.msra.mxu0 0.0
      %403 = vmatpush.msra.mxu0 0.0
      %404 = vmatpush.msra.mxu0 0.0
      %405 = vmatpush.msra.mxu0 %v339
      %406 = vmatpush.msra.mxu0 %v338
      %407 = vmatpush.msra.mxu0 %v337
      %408 = vmatpush.msra.mxu0 %v336
      %409 = vmatmul.f32.gmra.mxu0 %v387
      %v410 = vpop.f32.mrf.mxu0
      %v411 = vadd.f32 %v379, %v410
      %412 = vmatmul.f32.gmra.mxu0 %v389
      %v413 = vpop.f32.mrf.mxu0
      %v414 = vadd.f32 %v382, %v413
      %415 = vmatmul.f32.gmra.mxu0 %v391
      %v416 = vpop.f32.mrf.mxu0
      %v417 = vadd.f32 %v385, %v416
      %418 = vdwg.mxu0
      %s419 = scalar_lea.vmem %s2, 64
      %v420 = vld [vmem:[%s419] sm:$0xff]
      %v421 = vld [vmem:[%s419 + $0x8] sm:$0xff]
      %v422 = vld [vmem:[%s419 + $0x10] sm:$0xff]
      %v423 = vld [vmem:[%s419 + $0x18] sm:$0xff]
      %vm424 = vcmask 1045504
      %v425 = vrot.slane %v333, 2
      %v426 = vrot.slane %v334, 2
      %v427 = vsel %vm424, %v425, %v426
      %v428 = vrot.slane %v335, 2
      %v429 = vsel %vm424, %v426, %v428
      %v430 = vsel %vm354, %v427, 0
      %v432 = vsel %vm354, %v429, 0
      %v434 = vsel %vm354, %v428, 0
      %436 = vmatpush.msra.mxu0 0.0
      %437 = vmatpush.msra.mxu0 0.0
      %438 = vmatpush.msra.mxu0 0.0
      %439 = vmatpush.msra.mxu0 0.0
      %440 = vmatpush.msra.mxu0 0.0
      %441 = vmatpush.msra.mxu0 0.0
      %442 = vmatpush.msra.mxu0 0.0
      %443 = vmatpush.msra.mxu0 0.0
      %444 = vmatpush.msra.mxu0 0.0
      %445 = vmatpush.msra.mxu0 0.0
      %446 = vmatpush.msra.mxu0 0.0
      %447 = vmatpush.msra.mxu0 0.0
      %448 = vmatpush.msra.mxu0 %v423
      %449 = vmatpush.msra.mxu0 %v422
      %450 = vmatpush.msra.mxu0 %v421
      %451 = vmatpush.msra.mxu0 %v420
      %452 = vmatmul.f32.gmra.mxu0 %v430
      %v453 = vpop.f32.mrf.mxu0
      %v454 = vadd.f32 0.0, %v453
      %455 = vmatmul.f32.gmra.mxu0 %v432
      %v456 = vpop.f32.mrf.mxu0
      %v457 = vadd.f32 0.0, %v456
      %458 = vmatmul.f32.gmra.mxu0 %v434
      %v459 = vpop.f32.mrf.mxu0
      %v460 = vadd.f32 0.0, %v459
      %461 = vdwg.mxu0
      %v462 = vadd.f32 %v411, %v454
      %v463 = vadd.f32 %v414, %v457
      %v464 = vadd.f32 %v417, %v460
      %v465 = vmax.f32 %v462, 0.0
      %v466 = vmax.f32 %v463, 0.0
      %v467 = vmax.f32 %v464, 0.0
      %v468 = vld [vmem:[%s3] sm:$0xff]
      %vm469 = vcmask 64512
      %v471 = vsel %vm469, %v465, 0
      %v474 = vsel %vm469, %v466, 0
      %v477 = vsel %vm469, %v467, 0
      %479 = vmatpush.msra.mxu0 0.0
      %480 = vmatpush.msra.mxu0 0.0
      %481 = vmatpush.msra.mxu0 0.0
      %482 = vmatpush.msra.mxu0 0.0
      %483 = vmatpush.msra.mxu0 0.0
      %484 = vmatpush.msra.mxu0 0.0
      %485 = vmatpush.msra.mxu0 0.0
      %486 = vmatpush.msra.mxu0 0.0
      %487 = vmatpush.msra.mxu0 0.0
      %488 = vmatpush.msra.mxu0 0.0
      %489 = vmatpush.msra.mxu0 0.0
      %490 = vmatpush.msra.mxu0 0.0
      %491 = vmatpush.msra.mxu0 0.0
      %492 = vmatpush.msra.mxu0 0.0
      %493 = vmatpush.msra.mxu0 0.0
      %494 = vmatpush.msra.mxu0 %v468
      %495 = vmatmul.f32.gmra.mxu0 %v471
      %v496 = vpop.f32.mrf.mxu0
      %v497 = vadd.f32 0.0, %v496
      %498 = vmatmul.f32.gmra.mxu0 %v474
      %v499 = vpop.f32.mrf.mxu0
      %v500 = vadd.f32 0.0, %v499
      %501 = vmatmul.f32.gmra.mxu0 %v477
      %v502 = vpop.f32.mrf.mxu0
      %v503 = vadd.f32 0.0, %v502
      %504 = vdwg.mxu0
      %vm508 = vcmask 1040384
      %v509 = vrot.slane %v497, 7
      %v510 = vrot.slane %v500, 7
      %v511 = vsel %vm508, %v509, %v510
      %v512 = vrot.slane %v503, 7
      %v513 = vsel %vm508, %v510, %v512
      %v517 = vadd.f32 %v303, %v509
      %v518 = vadd.f32 %v304, %v511
      %v519 = vadd.f32 %v305, %v513
      %s520 = ssub.s32 %s302, 1
      %v521 = vstv %s520
      %v522 = vadd.s32 %v308, %v521
      %v523 = vadd.s32 %v309, %v521
      %v524 = vadd.s32 %v310, %v521
      %vm525 = vcmp.ge.s32.totalorder %v522, 0
      %vm526 = vcmp.ge.s32.totalorder %v523, 0
      %vm527 = vcmp.ge.s32.totalorder %v524, 0
      %vm528 = vcmp.lt.s32.totalorder %v522, 33
      %vm529 = vcmp.lt.s32.totalorder %v523, 33
      %vm530 = vcmp.lt.s32.totalorder %v524, 33
      %vm531 = vmand %vm525, %vm528
      %vm532 = vmand %vm526, %vm529
      %vm533 = vmand %vm527, %vm530
      %v534 = vmax.f32 %v517, 0.0
      %v535 = vmax.f32 %v518, 0.0
      %v536 = vmax.f32 %v519, 0.0
      %v537 = vsel %vm531, 1, 0
      %v538 = vsel %vm532, 1, 0
      %v539 = vsel %vm533, 1, 0
      %vm540 = vcmp.eq.s32.totalorder %v537, 1
      %vm541 = vcmp.eq.s32.totalorder %v538, 1
      %vm542 = vcmp.eq.s32.totalorder %v539, 1
      %v546 = vrot.slane %v534, 1
      %v547 = vrot.slane %v535, 1
      %v548 = vsel %vm348, %v546, %v547
      %v549 = vrot.slane %v536, 1
      %v550 = vsel %vm348, %v547, %v549
      %v554 = vsel %vm540, %v548, 0.0
      %v555 = vsel %vm541, %v550, 0.0
      %v556 = vsel %vm542, %v549, 0.0
      %s557 = scalar_lea.vmem %s2, 96
      %v558 = vld [vmem:[%s557] sm:$0xff]
      %v559 = vld [vmem:[%s557 + $0x8] sm:$0xff]
      %v560 = vld [vmem:[%s557 + $0x10] sm:$0xff]
      %v561 = vld [vmem:[%s557 + $0x18] sm:$0xff]
      %s562 = scalar_lea.vmem %s2, 128
      %v563 = vld [vmem:[%s562] sm:$0xff]
      %v564 = vld [vmem:[%s562 + $0x8] sm:$0xff]
      %v565 = vld [vmem:[%s562 + $0x10] sm:$0xff]
      %v566 = vld [vmem:[%s562 + $0x18] sm:$0xff]
      %v570 = vrot.slane %v554, 1
      %v571 = vrot.slane %v555, 1
      %v572 = vsel %vm348, %v570, %v571
      %v573 = vrot.slane %v556, 1
      %v574 = vsel %vm348, %v571, %v573
      %v575 = vsel %vm354, %v572, 0
      %v577 = vsel %vm354, %v574, 0
      %579 = vmatpush.msra.mxu0 0.0
      %580 = vmatpush.msra.mxu0 0.0
      %581 = vmatpush.msra.mxu0 0.0
      %582 = vmatpush.msra.mxu0 0.0
      %583 = vmatpush.msra.mxu0 0.0
      %584 = vmatpush.msra.mxu0 0.0
      %585 = vmatpush.msra.mxu0 0.0
      %586 = vmatpush.msra.mxu0 0.0
      %587 = vmatpush.msra.mxu0 0.0
      %588 = vmatpush.msra.mxu0 0.0
      %589 = vmatpush.msra.mxu0 0.0
      %590 = vmatpush.msra.mxu0 0.0
      %591 = vmatpush.msra.mxu0 %v566
      %592 = vmatpush.msra.mxu0 %v565
      %593 = vmatpush.msra.mxu0 %v564
      %594 = vmatpush.msra.mxu0 %v563
      %595 = vmatmul.f32.gmra.mxu0 %v575
      %v596 = vpop.f32.mrf.mxu0
      %v597 = vadd.f32 0.0, %v596
      %598 = vmatmul.f32.gmra.mxu0 %v577
      %v599 = vpop.f32.mrf.mxu0
      %v600 = vadd.f32 0.0, %v599
      %601 = vdwg.mxu0
      %v602 = vsel %vm354, %v554, 0
      %v604 = vsel %vm354, %v555, 0
      %606 = vmatpush.msra.mxu0 0.0
      %607 = vmatpush.msra.mxu0 0.0
      %608 = vmatpush.msra.mxu0 0.0
      %609 = vmatpush.msra.mxu0 0.0
      %610 = vmatpush.msra.mxu0 0.0
      %611 = vmatpush.msra.mxu0 0.0
      %612 = vmatpush.msra.mxu0 0.0
      %613 = vmatpush.msra.mxu0 0.0
      %614 = vmatpush.msra.mxu0 0.0
      %615 = vmatpush.msra.mxu0 0.0
      %616 = vmatpush.msra.mxu0 0.0
      %617 = vmatpush.msra.mxu0 0.0
      %618 = vmatpush.msra.mxu0 %v561
      %619 = vmatpush.msra.mxu0 %v560
      %620 = vmatpush.msra.mxu0 %v559
      %621 = vmatpush.msra.mxu0 %v558
      %622 = vmatmul.f32.gmra.mxu0 %v602
      %v623 = vpop.f32.mrf.mxu0
      %v624 = vadd.f32 %v597, %v623
      %625 = vmatmul.f32.gmra.mxu0 %v604
      %v626 = vpop.f32.mrf.mxu0
      %v627 = vadd.f32 %v600, %v626
      %628 = vdwg.mxu0
      %s629 = scalar_lea.vmem %s2, 160
      %v630 = vld [vmem:[%s629] sm:$0xff]
      %v631 = vld [vmem:[%s629 + $0x8] sm:$0xff]
      %v632 = vld [vmem:[%s629 + $0x10] sm:$0xff]
      %v633 = vld [vmem:[%s629 + $0x18] sm:$0xff]
      %v634 = vrot.slane %v554, 2
      %v635 = vrot.slane %v555, 2
      %v636 = vsel %vm424, %v634, %v635
      %v637 = vrot.slane %v556, 2
      %v638 = vsel %vm424, %v635, %v637
      %v639 = vsel %vm354, %v636, 0
      %v641 = vsel %vm354, %v638, 0
      %643 = vmatpush.msra.mxu0 0.0
      %644 = vmatpush.msra.mxu0 0.0
      %645 = vmatpush.msra.mxu0 0.0
      %646 = vmatpush.msra.mxu0 0.0
      %647 = vmatpush.msra.mxu0 0.0
      %648 = vmatpush.msra.mxu0 0.0
      %649 = vmatpush.msra.mxu0 0.0
      %650 = vmatpush.msra.mxu0 0.0
      %651 = vmatpush.msra.mxu0 0.0
      %652 = vmatpush.msra.mxu0 0.0
      %653 = vmatpush.msra.mxu0 0.0
      %654 = vmatpush.msra.mxu0 0.0
      %655 = vmatpush.msra.mxu0 %v633
      %656 = vmatpush.msra.mxu0 %v632
      %657 = vmatpush.msra.mxu0 %v631
      %658 = vmatpush.msra.mxu0 %v630
      %659 = vmatmul.f32.gmra.mxu0 %v639
      %v660 = vpop.f32.mrf.mxu0
      %v661 = vadd.f32 0.0, %v660
      %662 = vmatmul.f32.gmra.mxu0 %v641
      %v663 = vpop.f32.mrf.mxu0
      %v664 = vadd.f32 0.0, %v663
      %665 = vdwg.mxu0
      %v666 = vadd.f32 %v624, %v661
      %v667 = vadd.f32 %v627, %v664
      %v668 = vmax.f32 %v666, 0.0
      %v669 = vmax.f32 %v667, 0.0
      %s670 = scalar_lea.vmem %s3, 8
      %v671 = vld [vmem:[%s670] sm:$0xff]
      %v673 = vsel %vm469, %v668, 0
      %v676 = vsel %vm469, %v669, 0
      %678 = vmatpush.msra.mxu0 0.0
      %679 = vmatpush.msra.mxu0 0.0
      %680 = vmatpush.msra.mxu0 0.0
      %681 = vmatpush.msra.mxu0 0.0
      %682 = vmatpush.msra.mxu0 0.0
      %683 = vmatpush.msra.mxu0 0.0
      %684 = vmatpush.msra.mxu0 0.0
      %685 = vmatpush.msra.mxu0 0.0
      %686 = vmatpush.msra.mxu0 0.0
      %687 = vmatpush.msra.mxu0 0.0
      %688 = vmatpush.msra.mxu0 0.0
      %689 = vmatpush.msra.mxu0 0.0
      %690 = vmatpush.msra.mxu0 0.0
      %691 = vmatpush.msra.mxu0 0.0
      %692 = vmatpush.msra.mxu0 0.0
      %693 = vmatpush.msra.mxu0 %v671
      %694 = vmatmul.f32.gmra.mxu0 %v673
      %v695 = vpop.f32.mrf.mxu0
      %v696 = vadd.f32 0.0, %v695
      %697 = vmatmul.f32.gmra.mxu0 %v676
      %v698 = vpop.f32.mrf.mxu0
      %v699 = vadd.f32 0.0, %v698
      %700 = vdwg.mxu0
      %vm703 = vcmask 1041408
      %v704 = vrot.slane %v696, 6
      %v705 = vrot.slane %v699, 6
      %v706 = vsel %vm703, %v704, %v705
      %v710 = vadd.f32 %v517, %v704
      %v711 = vadd.f32 %v518, %v706
      %v712 = vadd.f32 %v519, %v705
      %v713 = vmax.f32 %v710, 0.0
      %v714 = vmax.f32 %v711, 0.0
      %v715 = vmax.f32 %v712, 0.0
      %v716 = vadd.f32 %v713, %v303
      %v717 = vadd.f32 %v714, %v304
      %v718 = vadd.f32 %v715, %v305
      %vm719 = vcmask 261122
      %720 = vst.msk [vmem:[%s300 - $0x2] sm:$0xfc] %vm719, %v716
      %721 = vst.msk [vmem:[%s300 + $0x6] sm:$0xff] %vm354, %v717
      %vm722 = vcmask 254976
      %723 = vst.msk [vmem:[%s300 + $0xe] sm:$0x3] %vm722, %v718
      %s724 = smul.u32 2, %s20
      %p725 = scmp.lt.s32.totalorder %s19, 1
      %s726 = scalar_select %p725, %s19, 1
      %p727 = scmp.lt.s32.totalorder %s724, 5
      %s728 = scalar_select %p727, %s724, 5
      %s729 = smul.addr %s726, 6
      %s730 = sadd.s32 %s728, %s729
      %s731 = smul.addr %s730, 8
      %s732 = scalar_lea.vmem %s4, %s731
      // Predicated region
      $region37: #{convolutional_encoder_forward.5} parent=35 // pred_check
        %p733 = pneg %p149
      $region38: #{convolutional_encoder_forward.5} parent=35 // pred_check_branch
        %735 = sbr.rel (%p733) target = $region40
      $region39: #{convolutional_encoder_forward.5} parent=35 // pred_region
        %s736 = smul.u32 2, %s20
      $region40: #{convolutional_encoder_forward.5} parent=35 // pred_fallthru
        _
    $region36: #{convolutional_encoder_forward.5} parent=5 // pred_fallthru
      _
    %p737 = scmp.le.s32.totalorder 2, %s10
    // Predicated region
    $region41: #{convolutional_encoder_forward.5} parent=5 // pred_check
      %p738 = pneg %p737
    $region42: #{convolutional_encoder_forward.5} parent=5 // pred_check_branch
      %740 = sbr.rel (%p738) target = $region44
    $region43: #{convolutional_encoder_forward.5} parent=5 // pred_region
      %s741 = ssub.s32 %s10, 2
      // Predicated region
      $region45: #{convolutional_encoder_forward.5} parent=43 // pred_check
        %p742 = pneg %p155
      $region46: #{convolutional_encoder_forward.5} parent=43 // pred_check_branch
        %744 = sbr.rel (%p742) target = $region48
      $region47: #{convolutional_encoder_forward.5} parent=43 // pred_region
        %s745 = smul.u32 2, %s22
        %p746 = scmp.lt.s32.totalorder %s21, 1
        %s747 = scalar_select %p746, %s21, 1
        %p748 = scmp.lt.s32.totalorder %s745, 5
        %s749 = scalar_select %p748, %s745, 5
        %s750 = smul.addr %s747, 6
        %s751 = sadd.s32 %s749, %s750
        %s752 = smul.addr %s751, 8
        %s753 = scalar_lea.vmem %s4, %s752
      $region48: #{convolutional_encoder_forward.5} parent=43 // pred_fallthru
        _
    $region44: #{convolutional_encoder_forward.5} parent=5 // pred_fallthru
      _
  $region6: #{convolutional_encoder_forward.5} parent=0 // loop_footer
    %s14 = sadd.s32 1, %s10
  $region7: #{convolutional_encoder_forward.5} parent=0 // loop_footer_branch
    %9 = sbr.rel target = $region3
  $region8: #{convolutional_encoder_forward.5} parent=0 // loop_exit
    _

</llo_original>
